<compile_context>
chip_gen: v5e
topology: v5e:2x2
jax: 0.10.0
libtpu: 0.0.40
codegen_flags: <defaults>
</compile_context>

<pallas_src>
import jax
import jax.numpy as jnp
import numpy as np
from jax import lax
from jax.experimental import pallas as pl
from jax.experimental.pallas import tpu as pltpu

NEG_SLOPE = 0.01  # nn.LeakyReLU default
_NT_DIMS = (((1,), (1,)), ((), ()))  # a @ b.T (contract last dims)


def _vmem_spec():
    return pl.BlockSpec(memory_space=pltpu.MemorySpace.VMEM)


def _const_spec(arr):
    nd = arr.ndim
    return pl.BlockSpec(arr.shape, lambda *_, _nd=nd: (0,) * _nd)


def _leaky(x):
    return jnp.where(x >= 0, x, NEG_SLOPE * x)


# ------------------------- fused LSTM-stack kernel --------------------------

def make_lstm_stack_kernel(W, M, U, n_layers):
    """All LSTM layers in one kernel.

    refs = (x, [wih, whh, b] * n_layers, out, seq_scratch)
    x is (W*M, Fin) timestep-major (row = t*M + m).  Intermediate layer
    sequences live in the (W*M, U) VMEM scratch; only the final (M, U)
    hidden state is written to the output.
    """
    def kernel(*refs):
        x_ref = refs[0]
        out_ref = refs[1 + 3 * n_layers]
        seq_buf = refs[2 + 3 * n_layers]
        for l in range(n_layers):
            wih = refs[1 + 3 * l][...]
            whh = refs[2 + 3 * l][...]
            b = refs[3 + 3 * l][...]
            # Hoisted input projection: ONE matmul for all W timesteps.
            src = x_ref[...] if l == 0 else seq_buf[...]
            gates_in = jnp.dot(src, wih, preferred_element_type=jnp.float32) + b
            h = jnp.zeros((M, U), jnp.float32)
            c = jnp.zeros((M, U), jnp.float32)
            last = (l == n_layers - 1)
            for t in range(W):  # static trip count -> unrolled at trace time
                g = gates_in[t * M:(t + 1) * M, :] + jnp.dot(
                    h, whh, preferred_element_type=jnp.float32)
                i_g = jax.nn.sigmoid(g[:, 0 * U:1 * U])
                f_g = jax.nn.sigmoid(g[:, 1 * U:2 * U])
                g_g = jnp.tanh(g[:, 2 * U:3 * U])
                o_g = jax.nn.sigmoid(g[:, 3 * U:4 * U])
                c = f_g * c + i_g * g_g
                h = o_g * jnp.tanh(c)
                if not last:
                    seq_buf[t * M:(t + 1) * M, :] = h
            if last:
                out_ref[...] = h
    return kernel


# ------------------- fused k-hop relational + FC-head kernel ----------------

def make_graph_fc_kernel(N, U, K, k_hops, hop_layers, fn_layers):
    R = 2 * U + K
    n_hop_mid = max(hop_layers - 2, 0)
    n_fc_mid = max(fn_layers - 2, 0)

    def kernel(*refs):
        # refs = (seq(1,N,U), maskd_T(N,N),
        #         per hop: w_i, w_j, peb, [w_mid, b_mid]*n_hop_mid, [wl(1,R), bl]_(hop_layers>=2),
        #         FC: ws, wr, b1, [w_mid, b_mid]*n_fc_mid, wlT(1,2U), bl   (or wsT, wrT, b1 if fn_layers==1),
        #         out(1,1,N))
        seq_ref, maskdT_ref = refs[0], refs[1]
        out_ref = refs[-1]
        it = iter(refs[2:-1])

        maskdT = maskdT_ref[...]            # maskdT[j, i] = mask[i, j] / D[i]
        seq = seq_ref[0]                    # (N, U) original sequential embedding
        e = seq                             # carried across hops as a value (stays in VMEM/vregs)

        for _hop in range(k_hops):
            wi = next(it)[...]              # (U, d1) acts on source e_i
            wj = next(it)[...]              # (U, d1) acts on target e_j
            peb = next(it)[...]             # (N, N, d1) hoisted enc@W_enc + b1, [j, i, :]
            p_i = jnp.dot(e, wi, preferred_element_type=jnp.float32)   # (N, d1)
            p_j = jnp.dot(e, wj, preferred_element_type=jnp.float32)   # (N, d1)
            # split-weight first layer: the (N,N,2U+K) concat is never built;
            # first mask multiply dropped (masked pairs are zeroed by maskdT below).
            h3 = _leaky(p_j[:, None, :] + p_i[None, :, :] + peb)        # (N, N, d1), [j, i, :]
            if hop_layers == 1:
                s = h3[:, :, 0]
            else:
                if n_hop_mid:
                    h2 = h3.reshape(N * N, R)       # flat across ALL mid layers
                    for _m in range(n_hop_mid):
                        w = next(it)[...]
                        b = next(it)[...]
                        h2 = _leaky(jnp.dot(h2, w, preferred_element_type=jnp.float32) + b)
                    h3 = h2.reshape(N, N, R)        # single reshape back
                wl = next(it)[...]                  # (1, R)
                bl = next(it)[...]                  # (1, 1)
                # last hop layer (dout=1) as a lane reduce -> (N, N) in [j, i]
                s = _leaky(jnp.sum(h3 * wl[None, :, :], axis=-1) + bl)
            # mask & 1/D scaling (precomputed), sum over source i (lane reduce)
            col = jnp.sum(s * maskdT, axis=1, keepdims=True)            # (N, 1)
            e = col * e                                                 # (N, U)

        # ---- FC head (concat folded into split weights) ----
        if fn_layers == 1:
            wsT = next(it)[...]                     # (1, U)
            wrT = next(it)[...]                     # (1, U)
            b1 = next(it)[...]                      # (1, 1)
            z = _leaky(lax.dot_general(wsT, seq, _NT_DIMS, preferred_element_type=jnp.float32)
                       + lax.dot_general(wrT, e, _NT_DIMS, preferred_element_type=jnp.float32)
                       + b1)                        # (1, N) lane-dense
        else:
            ws = next(it)[...]                      # (U, 2U)
            wr = next(it)[...]                      # (U, 2U)
            b1 = next(it)[...]                      # (1, 2U)
            h = _leaky(jnp.dot(seq, ws, preferred_element_type=jnp.float32)
                       + jnp.dot(e, wr, preferred_element_type=jnp.float32)
                       + b1)                        # (N, 2U)
            for _m in range(n_fc_mid):
                w = next(it)[...]
                b = next(it)[...]
                h = _leaky(jnp.dot(h, w, preferred_element_type=jnp.float32) + b)
            wlT = next(it)[...]                     # (1, 2U)  (last layer, transposed)
            bl = next(it)[...]                      # (1, 1)
            # lane-dense output row: w_last @ h^T -> (1, N)
            z = _leaky(lax.dot_general(wlT, h, _NT_DIMS, preferred_element_type=jnp.float32) + bl)
        out_ref[0] = z                              # block (1, 1, N)
    return kernel


def _build_graph_fc_inputs(seq_embeddings, rel_encoding, rel_mask, hops, fc, U):
    B, N, _ = seq_embeddings.shape
    K = rel_encoding.shape[-1]
    R = 2 * U + K
    hp = lax.Precision.HIGHEST

    # Constants shared across hops: mask/D in [target j, source i] order with a
    # zero-degree guard (PyTorch has no guard; valid inputs have D > 0).
    deg = jnp.sum(rel_mask, axis=-1, keepdims=True)                 # (N, 1) = D[i]
    maskd_T = (rel_mask / jnp.maximum(deg, 1.0)).T                  # [j, i] = mask[i, j]/D[i]
    enc_flat = jnp.transpose(rel_encoding, (1, 0, 2)).reshape(N * N, K)  # row j*N+i = enc[i, j]

    inputs = [seq_embeddings, maskd_T]
    in_specs = [pl.BlockSpec((1, N, U), lambda b: (b, 0, 0)), _const_spec(maskd_T)]

    def add_const(arr):
        inputs.append(arr)
        in_specs.append(_const_spec(arr))

    for hop in hops:
        wt1, b1 = hop[0]
        d1 = wt1.shape[1]
        w_i, w_j, w_e = wt1[:U], wt1[U:2 * U], wt1[2 * U:]
        # hoisted, batch/hop-invariant: enc @ W_enc + b1
        peb = (jnp.dot(enc_flat, w_e, precision=hp) + b1).reshape(N, N, d1)
        add_const(w_i)
        add_const(w_j)
        add_const(peb)
        for (wt, bm) in hop[1:-1]:
            add_const(wt)
            add_const(bm)
        if len(hop) >= 2:
            wl, bl = hop[-1]
            add_const(wl.reshape(1, R))
            add_const(bl)

    if len(fc) == 1:
        wt1, b1 = fc[0]                         # (2U, 1), (1, 1)
        add_const(wt1[:U].T)                    # (1, U)
        add_const(wt1[U:].T)                    # (1, U)
        add_const(b1)
    else:
        wt1, b1 = fc[0]                         # (2U, 2U), (1, 2U)
        add_const(wt1[:U])
        add_const(wt1[U:])
        add_const(b1)
        for (wt, bm) in fc[1:-1]:
            add_const(wt)
            add_const(bm)
        wl, bl = fc[-1]                         # (2U, 1), (1, 1)
        add_const(wl.reshape(1, 2 * U))         # transposed last-layer weight
        add_const(bl)

    return inputs, in_specs


# -------------------------- parameters / forward ---------------------------

def init_params(key, n_features, U, K, k_hops, hop_layers, fn_layers,
                lstm_layers):
    keys = iter(jax.random.split(key, 512))

    def lin(din, dout):
        bound = 1.0 / np.sqrt(din)
        wt = jax.random.uniform(next(keys), (din, dout), jnp.float32,
                                -bound, bound)
        b = jax.random.uniform(next(keys), (1, dout), jnp.float32,
                               -bound, bound)
        return wt, b

    params = {}
    lstm = []
    for layer in range(lstm_layers):
        fin = n_features if layer == 0 else U
        bound = 1.0 / np.sqrt(U)
        wih_t = jax.random.uniform(next(keys), (fin, 4 * U), jnp.float32,
                                   -bound, bound)
        whh_t = jax.random.uniform(next(keys), (U, 4 * U), jnp.float32,
                                   -bound, bound)
        b_ih = jax.random.uniform(next(keys), (1, 4 * U), jnp.float32,
                                  -bound, bound)
        b_hh = jax.random.uniform(next(keys), (1, 4 * U), jnp.float32,
                                  -bound, bound)
        lstm.append((wih_t, whh_t, b_ih + b_hh))
    params["lstm"] = lstm

    rel_in = 2 * U + K
    hops = []
    for _k in range(k_hops):
        layers = []
        for li in range(1, hop_layers + 1):
            dout = rel_in if li != hop_layers else 1
            layers.append(lin(rel_in, dout))
        hops.append(layers)
    params["hops"] = hops

    fc_in = 2 * U
    fc = []
    for li in range(1, fn_layers + 1):
        dout = fc_in if li != fn_layers else 1
        fc.append(lin(fc_in, dout))
    params["fc"] = fc
    return params


def temporal_sage_forward(params, input_data, rel_encoding, rel_mask, U):
    B, W, N, F = input_data.shape
    M = B * N
    K = rel_encoding.shape[-1]
    k_hops = len(params["hops"])
    hop_layers = len(params["hops"][0])
    fn_layers = len(params["fc"])
    n_lstm = len(params["lstm"])

    # ---- SequentialEmbedding layout: (B,W,N,F) -> (B,N,W,F) -> (M,W,F) -> (W*M, F)
    x = jnp.transpose(input_data, (0, 2, 1, 3)).reshape(M, W, F)
    x2d = jnp.transpose(x, (1, 0, 2)).reshape(W * M, F)     # row = t*M + m

    # ---- Fused LSTM stack: ONE pallas_call for all layers
    lstm_inputs = [x2d]
    for (wih_t, whh_t, b) in params["lstm"]:
        lstm_inputs += [wih_t, whh_t, b]
    seq2d = pl.pallas_call(
        make_lstm_stack_kernel(W, M, U, n_lstm),
        out_shape=jax.ShapeDtypeStruct((M, U), jnp.float32),
        in_specs=[_vmem_spec()] * len(lstm_inputs),
        out_specs=_vmem_spec(),
        scratch_shapes=[pltpu.VMEM((W * M, U), jnp.float32)],
    )(*lstm_inputs)
    seq_embeddings = seq2d.reshape(B, N, U)

    # ---- Fused k-hop RelationalEmbedding + FC head: ONE pallas_call
    # Grid over batch with "parallel" semantics: feeds both TCs on v7x; on
    # v5e/v6e the (B-1) extra grid steps cost <1 us and constant blocks are
    # DMA'd only once (their block index never changes).
    inputs, in_specs = _build_graph_fc_inputs(
        seq_embeddings, rel_encoding, rel_mask, params["hops"], params["fc"], U)
    out3 = pl.pallas_call(
        make_graph_fc_kernel(N, U, K, k_hops, hop_layers, fn_layers),
        out_shape=jax.ShapeDtypeStruct((B, 1, N), jnp.float32),
        grid=(B,),
        in_specs=in_specs,
        out_specs=pl.BlockSpec((1, 1, N), lambda b: (b, 0, 0)),
        compiler_params=pltpu.CompilerParams(dimension_semantics=("parallel",)),
    )(*inputs)
    return out3.reshape(B, N)                               # squeeze(-1)


# ------------------------- pure-JAX reference check ------------------------

def reference_forward(params, input_data, rel_encoding, rel_mask, U):
    hp = jax.lax.Precision.HIGHEST
    B, W, N, F = input_data.shape
    K = rel_encoding.shape[-1]
    out = jnp.transpose(input_data, (0, 2, 1, 3)).reshape(B * N, W, F)
    for (wih_t, whh_t, b) in params["lstm"]:
        M = out.shape[0]
        h = jnp.zeros((M, U), jnp.float32)
        c = jnp.zeros((M, U), jnp.float32)
        ys = []
        for t in range(W):
            gates = (jnp.dot(out[:, t, :], wih_t, precision=hp)
                     + jnp.dot(h, whh_t, precision=hp) + b)
            i_g = jax.nn.sigmoid(gates[:, :U])
            f_g = jax.nn.sigmoid(gates[:, U:2 * U])
            g_g = jnp.tanh(gates[:, 2 * U:3 * U])
            o_g = jax.nn.sigmoid(gates[:, 3 * U:4 * U])
            c = f_g * c + i_g * g_g
            h = o_g * jnp.tanh(c)
            ys.append(h)
        out = jnp.stack(ys, axis=1)
    seq_embeddings = out[:, -1, :].reshape(B, N, U)

    cur = seq_embeddings
    for hop_params in params["hops"]:
        e_i = jnp.broadcast_to(cur[:, :, None, :], (B, N, N, U))
        e_j = jnp.broadcast_to(cur[:, None, :, :], (B, N, N, U))
        enc = jnp.broadcast_to(rel_encoding[None], (B, N, N, K))
        combined = rel_mask[None, :, :, None] * jnp.concatenate(
            [e_i, e_j, enc], axis=-1)
        w = combined
        for (wt, b) in hop_params:
            w = _leaky(jnp.dot(w, wt, precision=hp) + b)
        weights = (rel_mask[None, :, :, None] * w)[..., 0]
        D = jnp.sum(rel_mask, axis=-1)
        sw = weights / D[None, :, None]
        col = jnp.sum(sw, axis=1)
        cur = col[:, :, None] * cur
    comb = jnp.concatenate([seq_embeddings, cur], axis=-1).reshape(B * N, 2 * U)
    for (wt, b) in params["fc"]:
        comb = _leaky(jnp.dot(comb, wt, precision=hp) + b)
    return comb.reshape(B, N)


# ----------------------------------- main -----------------------------------

if __name__ == "__main__":
    B, W, N, F = 2, 8, 8, 4          # input_shape = (batch, window, N, n_features)
    U, K = 16, 4                     # seq_embed_size, num relation types
    k_hops, hop_layers, fn_layers, lstm_layers = 2, 2, 2, 2

    key = jax.random.PRNGKey(0)
    k_in, k_enc, k_par = jax.random.split(key, 3)

    input_data = jax.random.normal(k_in, (B, W, N, F), jnp.float32)

    # relational encoding (N, N, K); add self-relation so every node degree > 0
    enc = jax.nn.relu(jax.random.normal(k_enc, (N, N, K), jnp.float32) - 0.3)
    enc = enc.at[jnp.arange(N), jnp.arange(N), 0].add(0.5)
    rel_mask = jnp.where(enc.sum(axis=-1) > 0, 1.0, 0.0).astype(jnp.float32)

    params = init_params(k_par, F, U, K, k_hops, hop_layers, fn_layers,
                         lstm_layers)

    out = temporal_sage_forward(params, input_data, enc, rel_mask, U)
    out = jax.block_until_ready(out)

    ref = reference_forward(params, input_data, enc, rel_mask, U)
    assert out.shape == (B, N)
    np.testing.assert_allclose(np.asarray(out), np.asarray(ref),
                               rtol=1e-2, atol=1e-2)
    print("KERNEL_OK")
</pallas_src>

<mosaic_0001>
module attributes {stable_mosaic.version = 11 : i64} {
  func.func @kernel(%arg0: memref<128x4xf32, #tpu.memory_space<vmem>>, %arg1: memref<4x64xf32, #tpu.memory_space<vmem>>, %arg2: memref<16x64xf32, #tpu.memory_space<vmem>>, %arg3: memref<1x64xf32, #tpu.memory_space<vmem>>, %arg4: memref<16x64xf32, #tpu.memory_space<vmem>>, %arg5: memref<16x64xf32, #tpu.memory_space<vmem>>, %arg6: memref<1x64xf32, #tpu.memory_space<vmem>>, %arg7: memref<16x16xf32, #tpu.memory_space<vmem>>, %arg8: memref<128x16xf32, #tpu.memory_space<vmem>>) attributes {dimension_semantics = [], scalar_prefetch = 0 : i64, scratch_operands = 1 : i64, tpu.core_type = #tpu.core_type<tc>} {
    %c0 = arith.constant 0 : index
    %c0_0 = arith.constant 0 : index
    %0 = vector.load %arg1[%c0, %c0_0] : memref<4x64xf32, #tpu.memory_space<vmem>>, vector<4x64xf32>
    %c0_1 = arith.constant 0 : index
    %c0_2 = arith.constant 0 : index
    %1 = vector.load %arg2[%c0_1, %c0_2] : memref<16x64xf32, #tpu.memory_space<vmem>>, vector<16x64xf32>
    %c0_3 = arith.constant 0 : index
    %c0_4 = arith.constant 0 : index
    %2 = vector.load %arg3[%c0_3, %c0_4] : memref<1x64xf32, #tpu.memory_space<vmem>>, vector<1x64xf32>
    %c0_5 = arith.constant 0 : index
    %c0_6 = arith.constant 0 : index
    %3 = vector.load %arg0[%c0_5, %c0_6] : memref<128x4xf32, #tpu.memory_space<vmem>>, vector<128x4xf32>
    %cst = arith.constant dense<0.000000e+00> : vector<128x64xf32>
    %4 = tpu.matmul %3, %0, %cst {dimension_numbers = #tpu.dot_dimension_numbers<[1], [0], [0], [1], [0, 0, 1, 1], [], []>} : vector<128x4xf32>, vector<4x64xf32>, vector<128x64xf32> -> vector<128x64xf32>
    %5 = vector.broadcast %2 : vector<1x64xf32> to vector<128x64xf32>
    %6 = arith.addf %4, %5 : vector<128x64xf32>
    %cst_7 = arith.constant 0.000000e+00 : f32
    %7 = vector.broadcast %cst_7 : f32 to vector<16x16xf32>
    %cst_8 = arith.constant 0.000000e+00 : f32
    %8 = vector.broadcast %cst_8 : f32 to vector<16x16xf32>
    %9 = vector.extract_strided_slice %6 {offsets = [0, 0], sizes = [16, 64], strides = [1, 1]} : vector<128x64xf32> to vector<16x64xf32>
    %cst_9 = arith.constant dense<0.000000e+00> : vector<16x64xf32>
    %10 = tpu.matmul %7, %1, %cst_9 {dimension_numbers = #tpu.dot_dimension_numbers<[1], [0], [0], [1], [0, 0, 1, 1], [], []>} : vector<16x16xf32>, vector<16x64xf32>, vector<16x64xf32> -> vector<16x64xf32>
    %11 = arith.addf %9, %10 : vector<16x64xf32>
    %12 = vector.extract_strided_slice %11 {offsets = [0, 0], sizes = [16, 16], strides = [1, 1]} : vector<16x64xf32> to vector<16x16xf32>
    %13 = arith.negf %12 : vector<16x16xf32>
    %14 = math.exp %13 : vector<16x16xf32>
    %cst_10 = arith.constant 1.000000e+00 : f32
    %15 = vector.broadcast %cst_10 : f32 to vector<16x16xf32>
    %16 = arith.addf %15, %14 : vector<16x16xf32>
    %17 = arith.divf %15, %16 : vector<16x16xf32>
    %18 = vector.extract_strided_slice %11 {offsets = [0, 16], sizes = [16, 16], strides = [1, 1]} : vector<16x64xf32> to vector<16x16xf32>
    %19 = arith.negf %18 : vector<16x16xf32>
    %20 = math.exp %19 : vector<16x16xf32>
    %cst_11 = arith.constant 1.000000e+00 : f32
    %21 = vector.broadcast %cst_11 : f32 to vector<16x16xf32>
    %22 = arith.addf %21, %20 : vector<16x16xf32>
    %23 = arith.divf %21, %22 : vector<16x16xf32>
    %24 = vector.extract_strided_slice %11 {offsets = [0, 32], sizes = [16, 16], strides = [1, 1]} : vector<16x64xf32> to vector<16x16xf32>
    %25 = math.tanh %24 : vector<16x16xf32>
    %26 = vector.extract_strided_slice %11 {offsets = [0, 48], sizes = [16, 16], strides = [1, 1]} : vector<16x64xf32> to vector<16x16xf32>
    %27 = arith.negf %26 : vector<16x16xf32>
    %28 = math.exp %27 : vector<16x16xf32>
    %cst_12 = arith.constant 1.000000e+00 : f32
    %29 = vector.broadcast %cst_12 : f32 to vector<16x16xf32>
    %30 = arith.addf %29, %28 : vector<16x16xf32>
    %31 = arith.divf %29, %30 : vector<16x16xf32>
    %32 = arith.mulf %23, %8 : vector<16x16xf32>
    %33 = arith.mulf %17, %25 : vector<16x16xf32>
    %34 = arith.addf %32, %33 : vector<16x16xf32>
    %35 = math.tanh %34 : vector<16x16xf32>
    %36 = arith.mulf %31, %35 : vector<16x16xf32>
    %c0_13 = arith.constant 0 : index
    %c0_14 = arith.constant 0 : index
    %37 = vector.load %arg8[%c0_13, %c0_14] : memref<128x16xf32, #tpu.memory_space<vmem>>, vector<16x16xf32>
    tpu.vector_store %arg8[%c0_13, %c0_14], %36 {strides = array<i32>} : memref<128x16xf32, #tpu.memory_space<vmem>>, vector<16x16xf32>,
    %38 = vector.extract_strided_slice %6 {offsets = [16, 0], sizes = [16, 64], strides = [1, 1]} : vector<128x64xf32> to vector<16x64xf32>
    %cst_15 = arith.constant dense<0.000000e+00> : vector<16x64xf32>
    %39 = tpu.matmul %36, %1, %cst_15 {dimension_numbers = #tpu.dot_dimension_numbers<[1], [0], [0], [1], [0, 0, 1, 1], [], []>} : vector<16x16xf32>, vector<16x64xf32>, vector<16x64xf32> -> vector<16x64xf32>
    %40 = arith.addf %38, %39 : vector<16x64xf32>
    %41 = vector.extract_strided_slice %40 {offsets = [0, 0], sizes = [16, 16], strides = [1, 1]} : vector<16x64xf32> to vector<16x16xf32>
    %42 = arith.negf %41 : vector<16x16xf32>
    %43 = math.exp %42 : vector<16x16xf32>
    %cst_16 = arith.constant 1.000000e+00 : f32
    %44 = vector.broadcast %cst_16 : f32 to vector<16x16xf32>
    %45 = arith.addf %44, %43 : vector<16x16xf32>
    %46 = arith.divf %44, %45 : vector<16x16xf32>
    %47 = vector.extract_strided_slice %40 {offsets = [0, 16], sizes = [16, 16], strides = [1, 1]} : vector<16x64xf32> to vector<16x16xf32>
    %48 = arith.negf %47 : vector<16x16xf32>
    %49 = math.exp %48 : vector<16x16xf32>
    %cst_17 = arith.constant 1.000000e+00 : f32
    %50 = vector.broadcast %cst_17 : f32 to vector<16x16xf32>
    %51 = arith.addf %50, %49 : vector<16x16xf32>
    %52 = arith.divf %50, %51 : vector<16x16xf32>
    %53 = vector.extract_strided_slice %40 {offsets = [0, 32], sizes = [16, 16], strides = [1, 1]} : vector<16x64xf32> to vector<16x16xf32>
    %54 = math.tanh %53 : vector<16x16xf32>
    %55 = vector.extract_strided_slice %40 {offsets = [0, 48], sizes = [16, 16], strides = [1, 1]} : vector<16x64xf32> to vector<16x16xf32>
    %56 = arith.negf %55 : vector<16x16xf32>
    %57 = math.exp %56 : vector<16x16xf32>
    %cst_18 = arith.constant 1.000000e+00 : f32
    %58 = vector.broadcast %cst_18 : f32 to vector<16x16xf32>
    %59 = arith.addf %58, %57 : vector<16x16xf32>
    %60 = arith.divf %58, %59 : vector<16x16xf32>
    %61 = arith.mulf %52, %34 : vector<16x16xf32>
    %62 = arith.mulf %46, %54 : vector<16x16xf32>
    %63 = arith.addf %61, %62 : vector<16x16xf32>
    %64 = math.tanh %63 : vector<16x16xf32>
    %65 = arith.mulf %60, %64 : vector<16x16xf32>
    %c16 = arith.constant 16 : index
    %c0_19 = arith.constant 0 : index
    %66 = vector.load %arg8[%c16, %c0_19] : memref<128x16xf32, #tpu.memory_space<vmem>>, vector<16x16xf32>
    tpu.vector_store %arg8[%c16, %c0_19], %65 {strides = array<i32>} : memref<128x16xf32, #tpu.memory_space<vmem>>, vector<16x16xf32>,
    %67 = vector.extract_strided_slice %6 {offsets = [32, 0], sizes = [16, 64], strides = [1, 1]} : vector<128x64xf32> to vector<16x64xf32>
    %cst_20 = arith.constant dense<0.000000e+00> : vector<16x64xf32>
    %68 = tpu.matmul %65, %1, %cst_20 {dimension_numbers = #tpu.dot_dimension_numbers<[1], [0], [0], [1], [0, 0, 1, 1], [], []>} : vector<16x16xf32>, vector<16x64xf32>, vector<16x64xf32> -> vector<16x64xf32>
    %69 = arith.addf %67, %68 : vector<16x64xf32>
    %70 = vector.extract_strided_slice %69 {offsets = [0, 0], sizes = [16, 16], strides = [1, 1]} : vector<16x64xf32> to vector<16x16xf32>
    %71 = arith.negf %70 : vector<16x16xf32>
    %72 = math.exp %71 : vector<16x16xf32>
    %cst_21 = arith.constant 1.000000e+00 : f32
    %73 = vector.broadcast %cst_21 : f32 to vector<16x16xf32>
    %74 = arith.addf %73, %72 : vector<16x16xf32>
    %75 = arith.divf %73, %74 : vector<16x16xf32>
    %76 = vector.extract_strided_slice %69 {offsets = [0, 16], sizes = [16, 16], strides = [1, 1]} : vector<16x64xf32> to vector<16x16xf32>
    %77 = arith.negf %76 : vector<16x16xf32>
    %78 = math.exp %77 : vector<16x16xf32>
    %cst_22 = arith.constant 1.000000e+00 : f32
    %79 = vector.broadcast %cst_22 : f32 to vector<16x16xf32>
    %80 = arith.addf %79, %78 : vector<16x16xf32>
    %81 = arith.divf %79, %80 : vector<16x16xf32>
    %82 = vector.extract_strided_slice %69 {offsets = [0, 32], sizes = [16, 16], strides = [1, 1]} : vector<16x64xf32> to vector<16x16xf32>
    %83 = math.tanh %82 : vector<16x16xf32>
    %84 = vector.extract_strided_slice %69 {offsets = [0, 48], sizes = [16, 16], strides = [1, 1]} : vector<16x64xf32> to vector<16x16xf32>
    %85 = arith.negf %84 : vector<16x16xf32>
    %86 = math.exp %85 : vector<16x16xf32>
    %cst_23 = arith.constant 1.000000e+00 : f32
    %87 = vector.broadcast %cst_23 : f32 to vector<16x16xf32>
    %88 = arith.addf %87, %86 : vector<16x16xf32>
    %89 = arith.divf %87, %88 : vector<16x16xf32>
    %90 = arith.mulf %81, %63 : vector<16x16xf32>
    %91 = arith.mulf %75, %83 : vector<16x16xf32>
    %92 = arith.addf %90, %91 : vector<16x16xf32>
    %93 = math.tanh %92 : vector<16x16xf32>
    %94 = arith.mulf %89, %93 : vector<16x16xf32>
    %c32 = arith.constant 32 : index
    %c0_24 = arith.constant 0 : index
    %95 = vector.load %arg8[%c32, %c0_24] : memref<128x16xf32, #tpu.memory_space<vmem>>, vector<16x16xf32>
    tpu.vector_store %arg8[%c32, %c0_24], %94 {strides = array<i32>} : memref<128x16xf32, #tpu.memory_space<vmem>>, vector<16x16xf32>,
    %96 = vector.extract_strided_slice %6 {offsets = [48, 0], sizes = [16, 64], strides = [1, 1]} : vector<128x64xf32> to vector<16x64xf32>
    %cst_25 = arith.constant dense<0.000000e+00> : vector<16x64xf32>
    %97 = tpu.matmul %94, %1, %cst_25 {dimension_numbers = #tpu.dot_dimension_numbers<[1], [0], [0], [1], [0, 0, 1, 1], [], []>} : vector<16x16xf32>, vector<16x64xf32>, vector<16x64xf32> -> vector<16x64xf32>
    %98 = arith.addf %96, %97 : vector<16x64xf32>
    %99 = vector.extract_strided_slice %98 {offsets = [0, 0], sizes = [16, 16], strides = [1, 1]} : vector<16x64xf32> to vector<16x16xf32>
    %100 = arith.negf %99 : vector<16x16xf32>
    %101 = math.exp %100 : vector<16x16xf32>
    %cst_26 = arith.constant 1.000000e+00 : f32
    %102 = vector.broadcast %cst_26 : f32 to vector<16x16xf32>
    %103 = arith.addf %102, %101 : vector<16x16xf32>
    %104 = arith.divf %102, %103 : vector<16x16xf32>
    %105 = vector.extract_strided_slice %98 {offsets = [0, 16], sizes = [16, 16], strides = [1, 1]} : vector<16x64xf32> to vector<16x16xf32>
    %106 = arith.negf %105 : vector<16x16xf32>
    %107 = math.exp %106 : vector<16x16xf32>
    %cst_27 = arith.constant 1.000000e+00 : f32
    %108 = vector.broadcast %cst_27 : f32 to vector<16x16xf32>
    %109 = arith.addf %108, %107 : vector<16x16xf32>
    %110 = arith.divf %108, %109 : vector<16x16xf32>
    %111 = vector.extract_strided_slice %98 {offsets = [0, 32], sizes = [16, 16], strides = [1, 1]} : vector<16x64xf32> to vector<16x16xf32>
    %112 = math.tanh %111 : vector<16x16xf32>
    %113 = vector.extract_strided_slice %98 {offsets = [0, 48], sizes = [16, 16], strides = [1, 1]} : vector<16x64xf32> to vector<16x16xf32>
    %114 = arith.negf %113 : vector<16x16xf32>
    %115 = math.exp %114 : vector<16x16xf32>
    %cst_28 = arith.constant 1.000000e+00 : f32
    %116 = vector.broadcast %cst_28 : f32 to vector<16x16xf32>
    %117 = arith.addf %116, %115 : vector<16x16xf32>
    %118 = arith.divf %116, %117 : vector<16x16xf32>
    %119 = arith.mulf %110, %92 : vector<16x16xf32>
    %120 = arith.mulf %104, %112 : vector<16x16xf32>
    %121 = arith.addf %119, %120 : vector<16x16xf32>
    %122 = math.tanh %121 : vector<16x16xf32>
    %123 = arith.mulf %118, %122 : vector<16x16xf32>
    %c48 = arith.constant 48 : index
    %c0_29 = arith.constant 0 : index
    %124 = vector.load %arg8[%c48, %c0_29] : memref<128x16xf32, #tpu.memory_space<vmem>>, vector<16x16xf32>
    tpu.vector_store %arg8[%c48, %c0_29], %123 {strides = array<i32>} : memref<128x16xf32, #tpu.memory_space<vmem>>, vector<16x16xf32>,
    %125 = vector.extract_strided_slice %6 {offsets = [64, 0], sizes = [16, 64], strides = [1, 1]} : vector<128x64xf32> to vector<16x64xf32>
    %cst_30 = arith.constant dense<0.000000e+00> : vector<16x64xf32>
    %126 = tpu.matmul %123, %1, %cst_30 {dimension_numbers = #tpu.dot_dimension_numbers<[1], [0], [0], [1], [0, 0, 1, 1], [], []>} : vector<16x16xf32>, vector<16x64xf32>, vector<16x64xf32> -> vector<16x64xf32>
    %127 = arith.addf %125, %126 : vector<16x64xf32>
    %128 = vector.extract_strided_slice %127 {offsets = [0, 0], sizes = [16, 16], strides = [1, 1]} : vector<16x64xf32> to vector<16x16xf32>
    %129 = arith.negf %128 : vector<16x16xf32>
    %130 = math.exp %129 : vector<16x16xf32>
    %cst_31 = arith.constant 1.000000e+00 : f32
    %131 = vector.broadcast %cst_31 : f32 to vector<16x16xf32>
    %132 = arith.addf %131, %130 : vector<16x16xf32>
    %133 = arith.divf %131, %132 : vector<16x16xf32>
    %134 = vector.extract_strided_slice %127 {offsets = [0, 16], sizes = [16, 16], strides = [1, 1]} : vector<16x64xf32> to vector<16x16xf32>
    %135 = arith.negf %134 : vector<16x16xf32>
    %136 = math.exp %135 : vector<16x16xf32>
    %cst_32 = arith.constant 1.000000e+00 : f32
    %137 = vector.broadcast %cst_32 : f32 to vector<16x16xf32>
    %138 = arith.addf %137, %136 : vector<16x16xf32>
    %139 = arith.divf %137, %138 : vector<16x16xf32>
    %140 = vector.extract_strided_slice %127 {offsets = [0, 32], sizes = [16, 16], strides = [1, 1]} : vector<16x64xf32> to vector<16x16xf32>
    %141 = math.tanh %140 : vector<16x16xf32>
    %142 = vector.extract_strided_slice %127 {offsets = [0, 48], sizes = [16, 16], strides = [1, 1]} : vector<16x64xf32> to vector<16x16xf32>
    %143 = arith.negf %142 : vector<16x16xf32>
    %144 = math.exp %143 : vector<16x16xf32>
    %cst_33 = arith.constant 1.000000e+00 : f32
    %145 = vector.broadcast %cst_33 : f32 to vector<16x16xf32>
    %146 = arith.addf %145, %144 : vector<16x16xf32>
    %147 = arith.divf %145, %146 : vector<16x16xf32>
    %148 = arith.mulf %139, %121 : vector<16x16xf32>
    %149 = arith.mulf %133, %141 : vector<16x16xf32>
    %150 = arith.addf %148, %149 : vector<16x16xf32>
    %151 = math.tanh %150 : vector<16x16xf32>
    %152 = arith.mulf %147, %151 : vector<16x16xf32>
    %c64 = arith.constant 64 : index
    %c0_34 = arith.constant 0 : index
    %153 = vector.load %arg8[%c64, %c0_34] : memref<128x16xf32, #tpu.memory_space<vmem>>, vector<16x16xf32>
    tpu.vector_store %arg8[%c64, %c0_34], %152 {strides = array<i32>} : memref<128x16xf32, #tpu.memory_space<vmem>>, vector<16x16xf32>,
    %154 = vector.extract_strided_slice %6 {offsets = [80, 0], sizes = [16, 64], strides = [1, 1]} : vector<128x64xf32> to vector<16x64xf32>
    %cst_35 = arith.constant dense<0.000000e+00> : vector<16x64xf32>
    %155 = tpu.matmul %152, %1, %cst_35 {dimension_numbers = #tpu.dot_dimension_numbers<[1], [0], [0], [1], [0, 0, 1, 1], [], []>} : vector<16x16xf32>, vector<16x64xf32>, vector<16x64xf32> -> vector<16x64xf32>
    %156 = arith.addf %154, %155 : vector<16x64xf32>
    %157 = vector.extract_strided_slice %156 {offsets = [0, 0], sizes = [16, 16], strides = [1, 1]} : vector<16x64xf32> to vector<16x16xf32>
    %158 = arith.negf %157 : vector<16x16xf32>
    %159 = math.exp %158 : vector<16x16xf32>
    %cst_36 = arith.constant 1.000000e+00 : f32
    %160 = vector.broadcast %cst_36 : f32 to vector<16x16xf32>
    %161 = arith.addf %160, %159 : vector<16x16xf32>
    %162 = arith.divf %160, %161 : vector<16x16xf32>
    %163 = vector.extract_strided_slice %156 {offsets = [0, 16], sizes = [16, 16], strides = [1, 1]} : vector<16x64xf32> to vector<16x16xf32>
    %164 = arith.negf %163 : vector<16x16xf32>
    %165 = math.exp %164 : vector<16x16xf32>
    %cst_37 = arith.constant 1.000000e+00 : f32
    %166 = vector.broadcast %cst_37 : f32 to vector<16x16xf32>
    %167 = arith.addf %166, %165 : vector<16x16xf32>
    %168 = arith.divf %166, %167 : vector<16x16xf32>
    %169 = vector.extract_strided_slice %156 {offsets = [0, 32], sizes = [16, 16], strides = [1, 1]} : vector<16x64xf32> to vector<16x16xf32>
    %170 = math.tanh %169 : vector<16x16xf32>
    %171 = vector.extract_strided_slice %156 {offsets = [0, 48], sizes = [16, 16], strides = [1, 1]} : vector<16x64xf32> to vector<16x16xf32>
    %172 = arith.negf %171 : vector<16x16xf32>
    %173 = math.exp %172 : vector<16x16xf32>
    %cst_38 = arith.constant 1.000000e+00 : f32
    %174 = vector.broadcast %cst_38 : f32 to vector<16x16xf32>
    %175 = arith.addf %174, %173 : vector<16x16xf32>
    %176 = arith.divf %174, %175 : vector<16x16xf32>
    %177 = arith.mulf %168, %150 : vector<16x16xf32>
    %178 = arith.mulf %162, %170 : vector<16x16xf32>
    %179 = arith.addf %177, %178 : vector<16x16xf32>
    %180 = math.tanh %179 : vector<16x16xf32>
    %181 = arith.mulf %176, %180 : vector<16x16xf32>
    %c80 = arith.constant 80 : index
    %c0_39 = arith.constant 0 : index
    %182 = vector.load %arg8[%c80, %c0_39] : memref<128x16xf32, #tpu.memory_space<vmem>>, vector<16x16xf32>
    tpu.vector_store %arg8[%c80, %c0_39], %181 {strides = array<i32>} : memref<128x16xf32, #tpu.memory_space<vmem>>, vector<16x16xf32>,
    %183 = vector.extract_strided_slice %6 {offsets = [96, 0], sizes = [16, 64], strides = [1, 1]} : vector<128x64xf32> to vector<16x64xf32>
    %cst_40 = arith.constant dense<0.000000e+00> : vector<16x64xf32>
    %184 = tpu.matmul %181, %1, %cst_40 {dimension_numbers = #tpu.dot_dimension_numbers<[1], [0], [0], [1], [0, 0, 1, 1], [], []>} : vector<16x16xf32>, vector<16x64xf32>, vector<16x64xf32> -> vector<16x64xf32>
    %185 = arith.addf %183, %184 : vector<16x64xf32>
    %186 = vector.extract_strided_slice %185 {offsets = [0, 0], sizes = [16, 16], strides = [1, 1]} : vector<16x64xf32> to vector<16x16xf32>
    %187 = arith.negf %186 : vector<16x16xf32>
    %188 = math.exp %187 : vector<16x16xf32>
    %cst_41 = arith.constant 1.000000e+00 : f32
    %189 = vector.broadcast %cst_41 : f32 to vector<16x16xf32>
    %190 = arith.addf %189, %188 : vector<16x16xf32>
    %191 = arith.divf %189, %190 : vector<16x16xf32>
    %192 = vector.extract_strided_slice %185 {offsets = [0, 16], sizes = [16, 16], strides = [1, 1]} : vector<16x64xf32> to vector<16x16xf32>
    %193 = arith.negf %192 : vector<16x16xf32>
    %194 = math.exp %193 : vector<16x16xf32>
    %cst_42 = arith.constant 1.000000e+00 : f32
    %195 = vector.broadcast %cst_42 : f32 to vector<16x16xf32>
    %196 = arith.addf %195, %194 : vector<16x16xf32>
    %197 = arith.divf %195, %196 : vector<16x16xf32>
    %198 = vector.extract_strided_slice %185 {offsets = [0, 32], sizes = [16, 16], strides = [1, 1]} : vector<16x64xf32> to vector<16x16xf32>
    %199 = math.tanh %198 : vector<16x16xf32>
    %200 = vector.extract_strided_slice %185 {offsets = [0, 48], sizes = [16, 16], strides = [1, 1]} : vector<16x64xf32> to vector<16x16xf32>
    %201 = arith.negf %200 : vector<16x16xf32>
    %202 = math.exp %201 : vector<16x16xf32>
    %cst_43 = arith.constant 1.000000e+00 : f32
    %203 = vector.broadcast %cst_43 : f32 to vector<16x16xf32>
    %204 = arith.addf %203, %202 : vector<16x16xf32>
    %205 = arith.divf %203, %204 : vector<16x16xf32>
    %206 = arith.mulf %197, %179 : vector<16x16xf32>
    %207 = arith.mulf %191, %199 : vector<16x16xf32>
    %208 = arith.addf %206, %207 : vector<16x16xf32>
    %209 = math.tanh %208 : vector<16x16xf32>
    %210 = arith.mulf %205, %209 : vector<16x16xf32>
    %c96 = arith.constant 96 : index
    %c0_44 = arith.constant 0 : index
    %211 = vector.load %arg8[%c96, %c0_44] : memref<128x16xf32, #tpu.memory_space<vmem>>, vector<16x16xf32>
    tpu.vector_store %arg8[%c96, %c0_44], %210 {strides = array<i32>} : memref<128x16xf32, #tpu.memory_space<vmem>>, vector<16x16xf32>,
    %212 = vector.extract_strided_slice %6 {offsets = [112, 0], sizes = [16, 64], strides = [1, 1]} : vector<128x64xf32> to vector<16x64xf32>
    %cst_45 = arith.constant dense<0.000000e+00> : vector<16x64xf32>
    %213 = tpu.matmul %210, %1, %cst_45 {dimension_numbers = #tpu.dot_dimension_numbers<[1], [0], [0], [1], [0, 0, 1, 1], [], []>} : vector<16x16xf32>, vector<16x64xf32>, vector<16x64xf32> -> vector<16x64xf32>
    %214 = arith.addf %212, %213 : vector<16x64xf32>
    %215 = vector.extract_strided_slice %214 {offsets = [0, 0], sizes = [16, 16], strides = [1, 1]} : vector<16x64xf32> to vector<16x16xf32>
    %216 = arith.negf %215 : vector<16x16xf32>
    %217 = math.exp %216 : vector<16x16xf32>
    %cst_46 = arith.constant 1.000000e+00 : f32
    %218 = vector.broadcast %cst_46 : f32 to vector<16x16xf32>
    %219 = arith.addf %218, %217 : vector<16x16xf32>
    %220 = arith.divf %218, %219 : vector<16x16xf32>
    %221 = vector.extract_strided_slice %214 {offsets = [0, 16], sizes = [16, 16], strides = [1, 1]} : vector<16x64xf32> to vector<16x16xf32>
    %222 = arith.negf %221 : vector<16x16xf32>
    %223 = math.exp %222 : vector<16x16xf32>
    %cst_47 = arith.constant 1.000000e+00 : f32
    %224 = vector.broadcast %cst_47 : f32 to vector<16x16xf32>
    %225 = arith.addf %224, %223 : vector<16x16xf32>
    %226 = arith.divf %224, %225 : vector<16x16xf32>
    %227 = vector.extract_strided_slice %214 {offsets = [0, 32], sizes = [16, 16], strides = [1, 1]} : vector<16x64xf32> to vector<16x16xf32>
    %228 = math.tanh %227 : vector<16x16xf32>
    %229 = vector.extract_strided_slice %214 {offsets = [0, 48], sizes = [16, 16], strides = [1, 1]} : vector<16x64xf32> to vector<16x16xf32>
    %230 = arith.negf %229 : vector<16x16xf32>
    %231 = math.exp %230 : vector<16x16xf32>
    %cst_48 = arith.constant 1.000000e+00 : f32
    %232 = vector.broadcast %cst_48 : f32 to vector<16x16xf32>
    %233 = arith.addf %232, %231 : vector<16x16xf32>
    %234 = arith.divf %232, %233 : vector<16x16xf32>
    %235 = arith.mulf %226, %208 : vector<16x16xf32>
    %236 = arith.mulf %220, %228 : vector<16x16xf32>
    %237 = arith.addf %235, %236 : vector<16x16xf32>
    %238 = math.tanh %237 : vector<16x16xf32>
    %239 = arith.mulf %234, %238 : vector<16x16xf32>
    %c112 = arith.constant 112 : index
    %c0_49 = arith.constant 0 : index
    %240 = vector.load %arg8[%c112, %c0_49] : memref<128x16xf32, #tpu.memory_space<vmem>>, vector<16x16xf32>
    tpu.vector_store %arg8[%c112, %c0_49], %239 {strides = array<i32>} : memref<128x16xf32, #tpu.memory_space<vmem>>, vector<16x16xf32>,
    %c0_50 = arith.constant 0 : index
    %c0_51 = arith.constant 0 : index
    %241 = vector.load %arg4[%c0_50, %c0_51] : memref<16x64xf32, #tpu.memory_space<vmem>>, vector<16x64xf32>
    %c0_52 = arith.constant 0 : index
    %c0_53 = arith.constant 0 : index
    %242 = vector.load %arg5[%c0_52, %c0_53] : memref<16x64xf32, #tpu.memory_space<vmem>>, vector<16x64xf32>
    %c0_54 = arith.constant 0 : index
    %c0_55 = arith.constant 0 : index
    %243 = vector.load %arg6[%c0_54, %c0_55] : memref<1x64xf32, #tpu.memory_space<vmem>>, vector<1x64xf32>
    %c0_56 = arith.constant 0 : index
    %c0_57 = arith.constant 0 : index
    %244 = vector.load %arg8[%c0_56, %c0_57] : memref<128x16xf32, #tpu.memory_space<vmem>>, vector<128x16xf32>
    %cst_58 = arith.constant dense<0.000000e+00> : vector<128x64xf32>
    %245 = tpu.matmul %244, %241, %cst_58 {dimension_numbers = #tpu.dot_dimension_numbers<[1], [0], [0], [1], [0, 0, 1, 1], [], []>} : vector<128x16xf32>, vector<16x64xf32>, vector<128x64xf32> -> vector<128x64xf32>
    %246 = vector.broadcast %243 : vector<1x64xf32> to vector<128x64xf32>
    %247 = arith.addf %245, %246 : vector<128x64xf32>
    %cst_59 = arith.constant 0.000000e+00 : f32
    %248 = vector.broadcast %cst_59 : f32 to vector<16x16xf32>
    %cst_60 = arith.constant 0.000000e+00 : f32
    %249 = vector.broadcast %cst_60 : f32 to vector<16x16xf32>
    %250 = vector.extract_strided_slice %247 {offsets = [0, 0], sizes = [16, 64], strides = [1, 1]} : vector<128x64xf32> to vector<16x64xf32>
    %cst_61 = arith.constant dense<0.000000e+00> : vector<16x64xf32>
    %251 = tpu.matmul %248, %242, %cst_61 {dimension_numbers = #tpu.dot_dimension_numbers<[1], [0], [0], [1], [0, 0, 1, 1], [], []>} : vector<16x16xf32>, vector<16x64xf32>, vector<16x64xf32> -> vector<16x64xf32>
    %252 = arith.addf %250, %251 : vector<16x64xf32>
    %253 = vector.extract_strided_slice %252 {offsets = [0, 0], sizes = [16, 16], strides = [1, 1]} : vector<16x64xf32> to vector<16x16xf32>
    %254 = arith.negf %253 : vector<16x16xf32>
    %255 = math.exp %254 : vector<16x16xf32>
    %cst_62 = arith.constant 1.000000e+00 : f32
    %256 = vector.broadcast %cst_62 : f32 to vector<16x16xf32>
    %257 = arith.addf %256, %255 : vector<16x16xf32>
    %258 = arith.divf %256, %257 : vector<16x16xf32>
    %259 = vector.extract_strided_slice %252 {offsets = [0, 16], sizes = [16, 16], strides = [1, 1]} : vector<16x64xf32> to vector<16x16xf32>
    %260 = arith.negf %259 : vector<16x16xf32>
    %261 = math.exp %260 : vector<16x16xf32>
    %cst_63 = arith.constant 1.000000e+00 : f32
    %262 = vector.broadcast %cst_63 : f32 to vector<16x16xf32>
    %263 = arith.addf %262, %261 : vector<16x16xf32>
    %264 = arith.divf %262, %263 : vector<16x16xf32>
    %265 = vector.extract_strided_slice %252 {offsets = [0, 32], sizes = [16, 16], strides = [1, 1]} : vector<16x64xf32> to vector<16x16xf32>
    %266 = math.tanh %265 : vector<16x16xf32>
    %267 = vector.extract_strided_slice %252 {offsets = [0, 48], sizes = [16, 16], strides = [1, 1]} : vector<16x64xf32> to vector<16x16xf32>
    %268 = arith.negf %267 : vector<16x16xf32>
    %269 = math.exp %268 : vector<16x16xf32>
    %cst_64 = arith.constant 1.000000e+00 : f32
    %270 = vector.broadcast %cst_64 : f32 to vector<16x16xf32>
    %271 = arith.addf %270, %269 : vector<16x16xf32>
    %272 = arith.divf %270, %271 : vector<16x16xf32>
    %273 = arith.mulf %264, %249 : vector<16x16xf32>
    %274 = arith.mulf %258, %266 : vector<16x16xf32>
    %275 = arith.addf %273, %274 : vector<16x16xf32>
    %276 = math.tanh %275 : vector<16x16xf32>
    %277 = arith.mulf %272, %276 : vector<16x16xf32>
    %278 = vector.extract_strided_slice %247 {offsets = [16, 0], sizes = [16, 64], strides = [1, 1]} : vector<128x64xf32> to vector<16x64xf32>
    %cst_65 = arith.constant dense<0.000000e+00> : vector<16x64xf32>
    %279 = tpu.matmul %277, %242, %cst_65 {dimension_numbers = #tpu.dot_dimension_numbers<[1], [0], [0], [1], [0, 0, 1, 1], [], []>} : vector<16x16xf32>, vector<16x64xf32>, vector<16x64xf32> -> vector<16x64xf32>
    %280 = arith.addf %278, %279 : vector<16x64xf32>
    %281 = vector.extract_strided_slice %280 {offsets = [0, 0], sizes = [16, 16], strides = [1, 1]} : vector<16x64xf32> to vector<16x16xf32>
    %282 = arith.negf %281 : vector<16x16xf32>
    %283 = math.exp %282 : vector<16x16xf32>
    %cst_66 = arith.constant 1.000000e+00 : f32
    %284 = vector.broadcast %cst_66 : f32 to vector<16x16xf32>
    %285 = arith.addf %284, %283 : vector<16x16xf32>
    %286 = arith.divf %284, %285 : vector<16x16xf32>
    %287 = vector.extract_strided_slice %280 {offsets = [0, 16], sizes = [16, 16], strides = [1, 1]} : vector<16x64xf32> to vector<16x16xf32>
    %288 = arith.negf %287 : vector<16x16xf32>
    %289 = math.exp %288 : vector<16x16xf32>
    %cst_67 = arith.constant 1.000000e+00 : f32
    %290 = vector.broadcast %cst_67 : f32 to vector<16x16xf32>
    %291 = arith.addf %290, %289 : vector<16x16xf32>
    %292 = arith.divf %290, %291 : vector<16x16xf32>
    %293 = vector.extract_strided_slice %280 {offsets = [0, 32], sizes = [16, 16], strides = [1, 1]} : vector<16x64xf32> to vector<16x16xf32>
    %294 = math.tanh %293 : vector<16x16xf32>
    %295 = vector.extract_strided_slice %280 {offsets = [0, 48], sizes = [16, 16], strides = [1, 1]} : vector<16x64xf32> to vector<16x16xf32>
    %296 = arith.negf %295 : vector<16x16xf32>
    %297 = math.exp %296 : vector<16x16xf32>
    %cst_68 = arith.constant 1.000000e+00 : f32
    %298 = vector.broadcast %cst_68 : f32 to vector<16x16xf32>
    %299 = arith.addf %298, %297 : vector<16x16xf32>
    %300 = arith.divf %298, %299 : vector<16x16xf32>
    %301 = arith.mulf %292, %275 : vector<16x16xf32>
    %302 = arith.mulf %286, %294 : vector<16x16xf32>
    %303 = arith.addf %301, %302 : vector<16x16xf32>
    %304 = math.tanh %303 : vector<16x16xf32>
    %305 = arith.mulf %300, %304 : vector<16x16xf32>
    %306 = vector.extract_strided_slice %247 {offsets = [32, 0], sizes = [16, 64], strides = [1, 1]} : vector<128x64xf32> to vector<16x64xf32>
    %cst_69 = arith.constant dense<0.000000e+00> : vector<16x64xf32>
    %307 = tpu.matmul %305, %242, %cst_69 {dimension_numbers = #tpu.dot_dimension_numbers<[1], [0], [0], [1], [0, 0, 1, 1], [], []>} : vector<16x16xf32>, vector<16x64xf32>, vector<16x64xf32> -> vector<16x64xf32>
    %308 = arith.addf %306, %307 : vector<16x64xf32>
    %309 = vector.extract_strided_slice %308 {offsets = [0, 0], sizes = [16, 16], strides = [1, 1]} : vector<16x64xf32> to vector<16x16xf32>
    %310 = arith.negf %309 : vector<16x16xf32>
    %311 = math.exp %310 : vector<16x16xf32>
    %cst_70 = arith.constant 1.000000e+00 : f32
    %312 = vector.broadcast %cst_70 : f32 to vector<16x16xf32>
    %313 = arith.addf %312, %311 : vector<16x16xf32>
    %314 = arith.divf %312, %313 : vector<16x16xf32>
    %315 = vector.extract_strided_slice %308 {offsets = [0, 16], sizes = [16, 16], strides = [1, 1]} : vector<16x64xf32> to vector<16x16xf32>
    %316 = arith.negf %315 : vector<16x16xf32>
    %317 = math.exp %316 : vector<16x16xf32>
    %cst_71 = arith.constant 1.000000e+00 : f32
    %318 = vector.broadcast %cst_71 : f32 to vector<16x16xf32>
    %319 = arith.addf %318, %317 : vector<16x16xf32>
    %320 = arith.divf %318, %319 : vector<16x16xf32>
    %321 = vector.extract_strided_slice %308 {offsets = [0, 32], sizes = [16, 16], strides = [1, 1]} : vector<16x64xf32> to vector<16x16xf32>
    %322 = math.tanh %321 : vector<16x16xf32>
    %323 = vector.extract_strided_slice %308 {offsets = [0, 48], sizes = [16, 16], strides = [1, 1]} : vector<16x64xf32> to vector<16x16xf32>
    %324 = arith.negf %323 : vector<16x16xf32>
    %325 = math.exp %324 : vector<16x16xf32>
    %cst_72 = arith.constant 1.000000e+00 : f32
    %326 = vector.broadcast %cst_72 : f32 to vector<16x16xf32>
    %327 = arith.addf %326, %325 : vector<16x16xf32>
    %328 = arith.divf %326, %327 : vector<16x16xf32>
    %329 = arith.mulf %320, %303 : vector<16x16xf32>
    %330 = arith.mulf %314, %322 : vector<16x16xf32>
    %331 = arith.addf %329, %330 : vector<16x16xf32>
    %332 = math.tanh %331 : vector<16x16xf32>
    %333 = arith.mulf %328, %332 : vector<16x16xf32>
    %334 = vector.extract_strided_slice %247 {offsets = [48, 0], sizes = [16, 64], strides = [1, 1]} : vector<128x64xf32> to vector<16x64xf32>
    %cst_73 = arith.constant dense<0.000000e+00> : vector<16x64xf32>
    %335 = tpu.matmul %333, %242, %cst_73 {dimension_numbers = #tpu.dot_dimension_numbers<[1], [0], [0], [1], [0, 0, 1, 1], [], []>} : vector<16x16xf32>, vector<16x64xf32>, vector<16x64xf32> -> vector<16x64xf32>
    %336 = arith.addf %334, %335 : vector<16x64xf32>
    %337 = vector.extract_strided_slice %336 {offsets = [0, 0], sizes = [16, 16], strides = [1, 1]} : vector<16x64xf32> to vector<16x16xf32>
    %338 = arith.negf %337 : vector<16x16xf32>
    %339 = math.exp %338 : vector<16x16xf32>
    %cst_74 = arith.constant 1.000000e+00 : f32
    %340 = vector.broadcast %cst_74 : f32 to vector<16x16xf32>
    %341 = arith.addf %340, %339 : vector<16x16xf32>
    %342 = arith.divf %340, %341 : vector<16x16xf32>
    %343 = vector.extract_strided_slice %336 {offsets = [0, 16], sizes = [16, 16], strides = [1, 1]} : vector<16x64xf32> to vector<16x16xf32>
    %344 = arith.negf %343 : vector<16x16xf32>
    %345 = math.exp %344 : vector<16x16xf32>
    %cst_75 = arith.constant 1.000000e+00 : f32
    %346 = vector.broadcast %cst_75 : f32 to vector<16x16xf32>
    %347 = arith.addf %346, %345 : vector<16x16xf32>
    %348 = arith.divf %346, %347 : vector<16x16xf32>
    %349 = vector.extract_strided_slice %336 {offsets = [0, 32], sizes = [16, 16], strides = [1, 1]} : vector<16x64xf32> to vector<16x16xf32>
    %350 = math.tanh %349 : vector<16x16xf32>
    %351 = vector.extract_strided_slice %336 {offsets = [0, 48], sizes = [16, 16], strides = [1, 1]} : vector<16x64xf32> to vector<16x16xf32>
    %352 = arith.negf %351 : vector<16x16xf32>
    %353 = math.exp %352 : vector<16x16xf32>
    %cst_76 = arith.constant 1.000000e+00 : f32
    %354 = vector.broadcast %cst_76 : f32 to vector<16x16xf32>
    %355 = arith.addf %354, %353 : vector<16x16xf32>
    %356 = arith.divf %354, %355 : vector<16x16xf32>
    %357 = arith.mulf %348, %331 : vector<16x16xf32>
    %358 = arith.mulf %342, %350 : vector<16x16xf32>
    %359 = arith.addf %357, %358 : vector<16x16xf32>
    %360 = math.tanh %359 : vector<16x16xf32>
    %361 = arith.mulf %356, %360 : vector<16x16xf32>
    %362 = vector.extract_strided_slice %247 {offsets = [64, 0], sizes = [16, 64], strides = [1, 1]} : vector<128x64xf32> to vector<16x64xf32>
    %cst_77 = arith.constant dense<0.000000e+00> : vector<16x64xf32>
    %363 = tpu.matmul %361, %242, %cst_77 {dimension_numbers = #tpu.dot_dimension_numbers<[1], [0], [0], [1], [0, 0, 1, 1], [], []>} : vector<16x16xf32>, vector<16x64xf32>, vector<16x64xf32> -> vector<16x64xf32>
    %364 = arith.addf %362, %363 : vector<16x64xf32>
    %365 = vector.extract_strided_slice %364 {offsets = [0, 0], sizes = [16, 16], strides = [1, 1]} : vector<16x64xf32> to vector<16x16xf32>
    %366 = arith.negf %365 : vector<16x16xf32>
    %367 = math.exp %366 : vector<16x16xf32>
    %cst_78 = arith.constant 1.000000e+00 : f32
    %368 = vector.broadcast %cst_78 : f32 to vector<16x16xf32>
    %369 = arith.addf %368, %367 : vector<16x16xf32>
    %370 = arith.divf %368, %369 : vector<16x16xf32>
    %371 = vector.extract_strided_slice %364 {offsets = [0, 16], sizes = [16, 16], strides = [1, 1]} : vector<16x64xf32> to vector<16x16xf32>
    %372 = arith.negf %371 : vector<16x16xf32>
    %373 = math.exp %372 : vector<16x16xf32>
    %cst_79 = arith.constant 1.000000e+00 : f32
    %374 = vector.broadcast %cst_79 : f32 to vector<16x16xf32>
    %375 = arith.addf %374, %373 : vector<16x16xf32>
    %376 = arith.divf %374, %375 : vector<16x16xf32>
    %377 = vector.extract_strided_slice %364 {offsets = [0, 32], sizes = [16, 16], strides = [1, 1]} : vector<16x64xf32> to vector<16x16xf32>
    %378 = math.tanh %377 : vector<16x16xf32>
    %379 = vector.extract_strided_slice %364 {offsets = [0, 48], sizes = [16, 16], strides = [1, 1]} : vector<16x64xf32> to vector<16x16xf32>
    %380 = arith.negf %379 : vector<16x16xf32>
    %381 = math.exp %380 : vector<16x16xf32>
    %cst_80 = arith.constant 1.000000e+00 : f32
    %382 = vector.broadcast %cst_80 : f32 to vector<16x16xf32>
    %383 = arith.addf %382, %381 : vector<16x16xf32>
    %384 = arith.divf %382, %383 : vector<16x16xf32>
    %385 = arith.mulf %376, %359 : vector<16x16xf32>
    %386 = arith.mulf %370, %378 : vector<16x16xf32>
    %387 = arith.addf %385, %386 : vector<16x16xf32>
    %388 = math.tanh %387 : vector<16x16xf32>
    %389 = arith.mulf %384, %388 : vector<16x16xf32>
    %390 = vector.extract_strided_slice %247 {offsets = [80, 0], sizes = [16, 64], strides = [1, 1]} : vector<128x64xf32> to vector<16x64xf32>
    %cst_81 = arith.constant dense<0.000000e+00> : vector<16x64xf32>
    %391 = tpu.matmul %389, %242, %cst_81 {dimension_numbers = #tpu.dot_dimension_numbers<[1], [0], [0], [1], [0, 0, 1, 1], [], []>} : vector<16x16xf32>, vector<16x64xf32>, vector<16x64xf32> -> vector<16x64xf32>
    %392 = arith.addf %390, %391 : vector<16x64xf32>
    %393 = vector.extract_strided_slice %392 {offsets = [0, 0], sizes = [16, 16], strides = [1, 1]} : vector<16x64xf32> to vector<16x16xf32>
    %394 = arith.negf %393 : vector<16x16xf32>
    %395 = math.exp %394 : vector<16x16xf32>
    %cst_82 = arith.constant 1.000000e+00 : f32
    %396 = vector.broadcast %cst_82 : f32 to vector<16x16xf32>
    %397 = arith.addf %396, %395 : vector<16x16xf32>
    %398 = arith.divf %396, %397 : vector<16x16xf32>
    %399 = vector.extract_strided_slice %392 {offsets = [0, 16], sizes = [16, 16], strides = [1, 1]} : vector<16x64xf32> to vector<16x16xf32>
    %400 = arith.negf %399 : vector<16x16xf32>
    %401 = math.exp %400 : vector<16x16xf32>
    %cst_83 = arith.constant 1.000000e+00 : f32
    %402 = vector.broadcast %cst_83 : f32 to vector<16x16xf32>
    %403 = arith.addf %402, %401 : vector<16x16xf32>
    %404 = arith.divf %402, %403 : vector<16x16xf32>
    %405 = vector.extract_strided_slice %392 {offsets = [0, 32], sizes = [16, 16], strides = [1, 1]} : vector<16x64xf32> to vector<16x16xf32>
    %406 = math.tanh %405 : vector<16x16xf32>
    %407 = vector.extract_strided_slice %392 {offsets = [0, 48], sizes = [16, 16], strides = [1, 1]} : vector<16x64xf32> to vector<16x16xf32>
    %408 = arith.negf %407 : vector<16x16xf32>
    %409 = math.exp %408 : vector<16x16xf32>
    %cst_84 = arith.constant 1.000000e+00 : f32
    %410 = vector.broadcast %cst_84 : f32 to vector<16x16xf32>
    %411 = arith.addf %410, %409 : vector<16x16xf32>
    %412 = arith.divf %410, %411 : vector<16x16xf32>
    %413 = arith.mulf %404, %387 : vector<16x16xf32>
    %414 = arith.mulf %398, %406 : vector<16x16xf32>
    %415 = arith.addf %413, %414 : vector<16x16xf32>
    %416 = math.tanh %415 : vector<16x16xf32>
    %417 = arith.mulf %412, %416 : vector<16x16xf32>
    %418 = vector.extract_strided_slice %247 {offsets = [96, 0], sizes = [16, 64], strides = [1, 1]} : vector<128x64xf32> to vector<16x64xf32>
    %cst_85 = arith.constant dense<0.000000e+00> : vector<16x64xf32>
    %419 = tpu.matmul %417, %242, %cst_85 {dimension_numbers = #tpu.dot_dimension_numbers<[1], [0], [0], [1], [0, 0, 1, 1], [], []>} : vector<16x16xf32>, vector<16x64xf32>, vector<16x64xf32> -> vector<16x64xf32>
    %420 = arith.addf %418, %419 : vector<16x64xf32>
    %421 = vector.extract_strided_slice %420 {offsets = [0, 0], sizes = [16, 16], strides = [1, 1]} : vector<16x64xf32> to vector<16x16xf32>
    %422 = arith.negf %421 : vector<16x16xf32>
    %423 = math.exp %422 : vector<16x16xf32>
    %cst_86 = arith.constant 1.000000e+00 : f32
    %424 = vector.broadcast %cst_86 : f32 to vector<16x16xf32>
    %425 = arith.addf %424, %423 : vector<16x16xf32>
    %426 = arith.divf %424, %425 : vector<16x16xf32>
    %427 = vector.extract_strided_slice %420 {offsets = [0, 16], sizes = [16, 16], strides = [1, 1]} : vector<16x64xf32> to vector<16x16xf32>
    %428 = arith.negf %427 : vector<16x16xf32>
    %429 = math.exp %428 : vector<16x16xf32>
    %cst_87 = arith.constant 1.000000e+00 : f32
    %430 = vector.broadcast %cst_87 : f32 to vector<16x16xf32>
    %431 = arith.addf %430, %429 : vector<16x16xf32>
    %432 = arith.divf %430, %431 : vector<16x16xf32>
    %433 = vector.extract_strided_slice %420 {offsets = [0, 32], sizes = [16, 16], strides = [1, 1]} : vector<16x64xf32> to vector<16x16xf32>
    %434 = math.tanh %433 : vector<16x16xf32>
    %435 = vector.extract_strided_slice %420 {offsets = [0, 48], sizes = [16, 16], strides = [1, 1]} : vector<16x64xf32> to vector<16x16xf32>
    %436 = arith.negf %435 : vector<16x16xf32>
    %437 = math.exp %436 : vector<16x16xf32>
    %cst_88 = arith.constant 1.000000e+00 : f32
    %438 = vector.broadcast %cst_88 : f32 to vector<16x16xf32>
    %439 = arith.addf %438, %437 : vector<16x16xf32>
    %440 = arith.divf %438, %439 : vector<16x16xf32>
    %441 = arith.mulf %432, %415 : vector<16x16xf32>
    %442 = arith.mulf %426, %434 : vector<16x16xf32>
    %443 = arith.addf %441, %442 : vector<16x16xf32>
    %444 = math.tanh %443 : vector<16x16xf32>
    %445 = arith.mulf %440, %444 : vector<16x16xf32>
    %446 = vector.extract_strided_slice %247 {offsets = [112, 0], sizes = [16, 64], strides = [1, 1]} : vector<128x64xf32> to vector<16x64xf32>
    %cst_89 = arith.constant dense<0.000000e+00> : vector<16x64xf32>
    %447 = tpu.matmul %445, %242, %cst_89 {dimension_numbers = #tpu.dot_dimension_numbers<[1], [0], [0], [1], [0, 0, 1, 1], [], []>} : vector<16x16xf32>, vector<16x64xf32>, vector<16x64xf32> -> vector<16x64xf32>
    %448 = arith.addf %446, %447 : vector<16x64xf32>
    %449 = vector.extract_strided_slice %448 {offsets = [0, 0], sizes = [16, 16], strides = [1, 1]} : vector<16x64xf32> to vector<16x16xf32>
    %450 = arith.negf %449 : vector<16x16xf32>
    %451 = math.exp %450 : vector<16x16xf32>
    %cst_90 = arith.constant 1.000000e+00 : f32
    %452 = vector.broadcast %cst_90 : f32 to vector<16x16xf32>
    %453 = arith.addf %452, %451 : vector<16x16xf32>
    %454 = arith.divf %452, %453 : vector<16x16xf32>
    %455 = vector.extract_strided_slice %448 {offsets = [0, 16], sizes = [16, 16], strides = [1, 1]} : vector<16x64xf32> to vector<16x16xf32>
    %456 = arith.negf %455 : vector<16x16xf32>
    %457 = math.exp %456 : vector<16x16xf32>
    %cst_91 = arith.constant 1.000000e+00 : f32
    %458 = vector.broadcast %cst_91 : f32 to vector<16x16xf32>
    %459 = arith.addf %458, %457 : vector<16x16xf32>
    %460 = arith.divf %458, %459 : vector<16x16xf32>
    %461 = vector.extract_strided_slice %448 {offsets = [0, 32], sizes = [16, 16], strides = [1, 1]} : vector<16x64xf32> to vector<16x16xf32>
    %462 = math.tanh %461 : vector<16x16xf32>
    %463 = vector.extract_strided_slice %448 {offsets = [0, 48], sizes = [16, 16], strides = [1, 1]} : vector<16x64xf32> to vector<16x16xf32>
    %464 = arith.negf %463 : vector<16x16xf32>
    %465 = math.exp %464 : vector<16x16xf32>
    %cst_92 = arith.constant 1.000000e+00 : f32
    %466 = vector.broadcast %cst_92 : f32 to vector<16x16xf32>
    %467 = arith.addf %466, %465 : vector<16x16xf32>
    %468 = arith.divf %466, %467 : vector<16x16xf32>
    %469 = arith.mulf %460, %443 : vector<16x16xf32>
    %470 = arith.mulf %454, %462 : vector<16x16xf32>
    %471 = arith.addf %469, %470 : vector<16x16xf32>
    %472 = math.tanh %471 : vector<16x16xf32>
    %473 = arith.mulf %468, %472 : vector<16x16xf32>
    %c0_93 = arith.constant 0 : index
    %c0_94 = arith.constant 0 : index
    %474 = vector.load %arg7[%c0_93, %c0_94] : memref<16x16xf32, #tpu.memory_space<vmem>>, vector<16x16xf32>
    tpu.vector_store %arg7[%c0_93, %c0_94], %473 {strides = array<i32>} : memref<16x16xf32, #tpu.memory_space<vmem>>, vector<16x16xf32>,
    return
  }
}

</mosaic_0001>

<llo_original>
// kernel: tpu_custom_call.1
$region0: #{tpu_custom_call.1}
  #allocation0 [shape = 'u32[]', space=smem, size = 0x4, offset = 0x4, fixed_abs, tag = 'smem constant byte address 0x4 - core index']
  #allocation1 [shape = 'u32[72,128]{1,0:T(1,128)}', space=vmem, size = 0x9000, scoped, tag = 'internal scratch']
  #allocation2 [shape = 'f32[128,16]{1,0:T(8,128)}', space=vmem, size = 0x10000, scoped, tag = 'scratch operand']
  %s0 = inlined_call_operand.vmem [shape: f32[128,4], index: 0, kind: input, shape index: {}]
  %s1 = inlined_call_operand.vmem [shape: f32[4,64], index: 1, kind: input, shape index: {}]
  %s2 = inlined_call_operand.vmem [shape: f32[16,64], index: 2, kind: input, shape index: {}]
  %s3 = inlined_call_operand.vmem [shape: f32[1,64], index: 3, kind: input, shape index: {}]
  %s4 = inlined_call_operand.vmem [shape: f32[16,64], index: 4, kind: input, shape index: {}]
  %s5 = inlined_call_operand.vmem [shape: f32[16,64], index: 5, kind: input, shape index: {}]
  %s6 = inlined_call_operand.vmem [shape: f32[1,64], index: 6, kind: input, shape index: {}]
  %s7 = inlined_call_operand.hbm [shape: f32[16,16], index: 7, kind: output, shape index: {}]
  %s8 = sld [smem:[#allocation0]]
  $region38: #{tpu_custom_call.1} parent=0
    _
  %s10 = ssub.s32 1, %s8
  %s11 = scalar_select 0, %s10, %s8
  $region1: #{tpu_custom_call.1} parent=0
    #allocation3 [shape = 'u8[8192]{0}', space=vmem, size = 0x2000, scoped, tag = 'output window, operand 0, single buffered']
    #allocation4 [shape = 's32[1]{0}', space=sflag, size = 0x4, scoped, tag = 'scoped memory for tpu_custom_call.1']
    %12 = vsyncpa [#allocation4], 0
    // Predicated region
    $region2: #{tpu_custom_call.1} parent=1 // pred_check
      _
    $region3: #{tpu_custom_call.1} parent=1 // pred_check_branch
      %14 = sbr.rel (0) target = $region5
    $region4: #{tpu_custom_call.1} parent=1 // pred_region
      _
    $region5: #{tpu_custom_call.1} parent=1 // pred_fallthru
      _
    // Predicated region
    $region6: #{tpu_custom_call.1} parent=1 // pred_check
      _
    $region7: #{tpu_custom_call.1} parent=1 // pred_check_branch
      %16 = sbr.rel (0) target = $region9
    $region8: #{tpu_custom_call.1} parent=1 // pred_region
      _
    $region9: #{tpu_custom_call.1} parent=1 // pred_fallthru
      _
    // Predicated region
    $region10: #{tpu_custom_call.1} parent=1 // pred_check
      _
    $region11: #{tpu_custom_call.1} parent=1 // pred_check_branch
      %18 = sbr.rel (0) target = $region13
    $region12: #{tpu_custom_call.1} parent=1 // pred_region
      _
    $region13: #{tpu_custom_call.1} parent=1 // pred_fallthru
      _
    // Predicated region
    $region14: #{tpu_custom_call.1} parent=1 // pred_check
      _
    $region15: #{tpu_custom_call.1} parent=1 // pred_check_branch
      %20 = sbr.rel (0) target = $region17
    $region16: #{tpu_custom_call.1} parent=1 // pred_region
      _
    $region17: #{tpu_custom_call.1} parent=1 // pred_fallthru
      _
    // Predicated region
    $region18: #{tpu_custom_call.1} parent=1 // pred_check
      _
    $region19: #{tpu_custom_call.1} parent=1 // pred_check_branch
      %22 = sbr.rel (0) target = $region21
    $region20: #{tpu_custom_call.1} parent=1 // pred_region
      _
    $region21: #{tpu_custom_call.1} parent=1 // pred_fallthru
      _
    // Predicated region
    $region22: #{tpu_custom_call.1} parent=1 // pred_check
      _
    $region23: #{tpu_custom_call.1} parent=1 // pred_check_branch
      %24 = sbr.rel (0) target = $region25
    $region24: #{tpu_custom_call.1} parent=1 // pred_region
      _
    $region25: #{tpu_custom_call.1} parent=1 // pred_fallthru
      _
    // Predicated region
    $region26: #{tpu_custom_call.1} parent=1 // pred_check
      _
    $region27: #{tpu_custom_call.1} parent=1 // pred_check_branch
      %26 = sbr.rel (0) target = $region29
    $region28: #{tpu_custom_call.1} parent=1 // pred_region
      _
    $region29: #{tpu_custom_call.1} parent=1 // pred_fallthru
      _
    %v27 = vld [vmem:[%s1] sm:$0xf]
    %v28 = vld [vmem:[%s2] sm:$0xff]
    %v29 = vld [vmem:[%s2 + $0x8] sm:$0xff]
    %v30 = vld [vmem:[%s3] sm:$0x1]
    %v31 = vld [vmem:[%s0] sm:$0xff]
    %v32 = vld [vmem:[%s0 + $0x8] sm:$0xff]
    %v33 = vld [vmem:[%s0 + $0x10] sm:$0xff]
    %v34 = vld [vmem:[%s0 + $0x18] sm:$0xff]
    %v35 = vld [vmem:[%s0 + $0x20] sm:$0xff]
    %v36 = vld [vmem:[%s0 + $0x28] sm:$0xff]
    %v37 = vld [vmem:[%s0 + $0x30] sm:$0xff]
    %v38 = vld [vmem:[%s0 + $0x38] sm:$0xff]
    %v39 = vld [vmem:[%s0 + $0x40] sm:$0xff]
    %v40 = vld [vmem:[%s0 + $0x48] sm:$0xff]
    %v41 = vld [vmem:[%s0 + $0x50] sm:$0xff]
    %v42 = vld [vmem:[%s0 + $0x58] sm:$0xff]
    %v43 = vld [vmem:[%s0 + $0x60] sm:$0xff]
    %v44 = vld [vmem:[%s0 + $0x68] sm:$0xff]
    %v45 = vld [vmem:[%s0 + $0x70] sm:$0xff]
    %v46 = vld [vmem:[%s0 + $0x78] sm:$0xff]
    %v48 = vperm.slane %v30, 0
    %vm50 = vcmask 31744
    %v52 = vsel %vm50, %v31, 0
    %v55 = vsel %vm50, %v32, 0
    %v58 = vsel %vm50, %v33, 0
    %v61 = vsel %vm50, %v34, 0
    %v64 = vsel %vm50, %v35, 0
    %v67 = vsel %vm50, %v36, 0
    %v70 = vsel %vm50, %v37, 0
    %v73 = vsel %vm50, %v38, 0
    %v76 = vsel %vm50, %v39, 0
    %v79 = vsel %vm50, %v40, 0
    %v82 = vsel %vm50, %v41, 0
    %v85 = vsel %vm50, %v42, 0
    %v88 = vsel %vm50, %v43, 0
    %v91 = vsel %vm50, %v44, 0
    %v94 = vsel %vm50, %v45, 0
    %v97 = vsel %vm50, %v46, 0
    %vm99 = vcmask 1043456
    %v101 = vsel %vm99, %v27, 0
    %103 = vmatpush.msra.mxu0 0.0
    %104 = vmatpush.msra.mxu0 0.0
    %105 = vmatpush.msra.mxu0 0.0
    %106 = vmatpush.msra.mxu0 0.0
    %107 = vmatpush.msra.mxu0 0.0
    %108 = vmatpush.msra.mxu0 0.0
    %109 = vmatpush.msra.mxu0 0.0
    %110 = vmatpush.msra.mxu0 0.0
    %111 = vmatpush.msra.mxu0 0.0
    %112 = vmatpush.msra.mxu0 0.0
    %113 = vmatpush.msra.mxu0 0.0
    %114 = vmatpush.msra.mxu0 0.0
    %115 = vmatpush.msra.mxu0 0.0
    %116 = vmatpush.msra.mxu0 0.0
    %117 = vmatpush.msra.mxu0 0.0
    %118 = vmatpush.msra.mxu0 %v101
    %119 = vmatmul.f32.gmra.mxu0 %v52
    %v120 = vpop.f32.mrf.mxu0
    %v121 = vadd.f32 %v48, %v120
    %122 = vmatmul.f32.gmra.mxu0 %v55
    %v123 = vpop.f32.mrf.mxu0
    %v124 = vadd.f32 %v48, %v123
    %125 = vmatmul.f32.gmra.mxu0 %v58
    %v126 = vpop.f32.mrf.mxu0
    %v127 = vadd.f32 %v48, %v126
    %128 = vmatmul.f32.gmra.mxu0 %v61
    %v129 = vpop.f32.mrf.mxu0
    %v130 = vadd.f32 %v48, %v129
    %131 = vmatmul.f32.gmra.mxu0 %v64
    %v132 = vpop.f32.mrf.mxu0
    %v133 = vadd.f32 %v48, %v132
    %134 = vmatmul.f32.gmra.mxu0 %v67
    %v135 = vpop.f32.mrf.mxu0
    %v136 = vadd.f32 %v48, %v135
    %137 = vmatmul.f32.gmra.mxu0 %v70
    %v138 = vpop.f32.mrf.mxu0
    %v139 = vadd.f32 %v48, %v138
    %140 = vmatmul.f32.gmra.mxu0 %v73
    %v141 = vpop.f32.mrf.mxu0
    %v142 = vadd.f32 %v48, %v141
    %143 = vmatmul.f32.gmra.mxu0 %v76
    %v144 = vpop.f32.mrf.mxu0
    %v145 = vadd.f32 %v48, %v144
    %146 = vmatmul.f32.gmra.mxu0 %v79
    %v147 = vpop.f32.mrf.mxu0
    %v148 = vadd.f32 %v48, %v147
    %149 = vmatmul.f32.gmra.mxu0 %v82
    %v150 = vpop.f32.mrf.mxu0
    %v151 = vadd.f32 %v48, %v150
    %152 = vmatmul.f32.gmra.mxu0 %v85
    %v153 = vpop.f32.mrf.mxu0
    %v154 = vadd.f32 %v48, %v153
    %155 = vmatmul.f32.gmra.mxu0 %v88
    %v156 = vpop.f32.mrf.mxu0
    %v157 = vadd.f32 %v48, %v156
    %158 = vmatmul.f32.gmra.mxu0 %v91
    %v159 = vpop.f32.mrf.mxu0
    %v160 = vadd.f32 %v48, %v159
    %161 = vmatmul.f32.gmra.mxu0 %v94
    %v162 = vpop.f32.mrf.mxu0
    %v163 = vadd.f32 %v48, %v162
    %164 = vmatmul.f32.gmra.mxu0 %v97
    %v165 = vpop.f32.mrf.mxu0
    %v166 = vadd.f32 %v48, %v165
    %167 = vdwg.mxu0
    %vm168 = vcmask 130048
    %v170 = vsel %vm168, 0.0, 0
    %172 = vmatpush.msra.mxu0 0.0
    %173 = vmatpush.msra.mxu0 0.0
    %174 = vmatpush.msra.mxu0 0.0
    %175 = vmatpush.msra.mxu0 0.0
    %176 = vmatpush.msra.mxu0 0.0
    %177 = vmatpush.msra.mxu0 0.0
    %178 = vmatpush.msra.mxu0 0.0
    %179 = vmatpush.msra.mxu0 0.0
    %180 = vmatpush.msra.mxu0 0.0
    %181 = vmatpush.msra.mxu0 0.0
    %182 = vmatpush.msra.mxu0 0.0
    %183 = vmatpush.msra.mxu0 0.0
    %184 = vmatpush.msra.mxu0 0.0
    %185 = vmatpush.msra.mxu0 0.0
    %186 = vmatpush.msra.mxu0 %v29
    %187 = vmatpush.msra.mxu0 %v28
    %188 = vmatmul.f32.gmra.mxu0 %v170
    %v189 = vpop.f32.mrf.mxu0
    %v190 = vadd.f32 0.0, %v189
    %191 = vmatmul.f32.gmra.mxu0 %v170
    %v192 = vpop.f32.mrf.mxu0
    %v193 = vadd.f32 0.0, %v192
    %194 = vdwg.mxu0
    %v195 = vadd.f32 %v121, %v190
    %v196 = vadd.f32 %v124, %v193
    %v197 = vxor.u32 %v195, 2147483648
    %v198 = vxor.u32 %v196, 2147483648
    %v199 = vmul.f32 %v197, 1.442695
    %v200 = vpow.pop %v199
    %v201 = vmul.f32 %v198, 1.442695
    %v202 = vpow.pop %v201
    %v203 = vadd.f32 %v200, 1.0
    %v204 = vadd.f32 %v202, 1.0
    %v205 = vrcp.pop %v203
    %v206 = vmul.f32 %v203, %v205
    %v207 = vsub.f32 1.0, %v206
    %v208 = vmul.f32 %v205, %v207
    %v209 = vadd.f32 %v205, %v208
    %vm210 = vweird.f32 %v203
    %vm211 = vweird.f32 %v205
    %vm212 = vmor %vm210, %vm211
    %v213 = vsel %vm212, %v205, %v209
    %v214 = vand.u32 2147483647, %v203
    %vm215 = vcmp.eq.f32.partialorder %v214, 8.507059e+37
    %v216 = vand.u32 %v203, 2147483648
    %v217 = vor.u32 1.1754944e-38, %v216
    %v218 = vsel %vm215, %v217, %v213
    %v219 = vmul.f32 1.0, %v218
    %v220 = vrcp.pop %v204
    %v221 = vmul.f32 %v204, %v220
    %v222 = vsub.f32 1.0, %v221
    %v223 = vmul.f32 %v220, %v222
    %v224 = vadd.f32 %v220, %v223
    %vm225 = vweird.f32 %v204
    %vm226 = vweird.f32 %v220
    %vm227 = vmor %vm225, %vm226
    %v228 = vsel %vm227, %v220, %v224
    %v229 = vand.u32 2147483647, %v204
    %vm230 = vcmp.eq.f32.partialorder %v229, 8.507059e+37
    %v231 = vand.u32 %v204, 2147483648
    %v232 = vor.u32 1.1754944e-38, %v231
    %v233 = vsel %vm230, %v232, %v228
    %v234 = vmul.f32 1.0, %v233
    %v235 = vtanh.pop %v195
    %v236 = vtanh.pop %v196
    %v237 = vmul.f32 %v219, 0.0
    %v238 = vmul.f32 %v234, 0.0
    %241 = vrot.lane.b32.xlu0 %v235, 96
    %v242 = vpop.permute.xlu0 %241
    %243 = vrot.lane.b32.xlu0 %v236, 96
    %v244 = vpop.permute.xlu0 %243
    %v247 = vmul.f32 %v219, %v242
    %v248 = vmul.f32 %v234, %v244
    %251 = vrot.lane.b32.xlu0 %v247, 16
    %v252 = vpop.permute.xlu0 %251
    %253 = vrot.lane.b32.xlu0 %v248, 16
    %v254 = vpop.permute.xlu0 %253
    %v257 = vadd.f32 %v237, %v252
    %v258 = vadd.f32 %v238, %v254
    %v259 = vtanh.pop %v257
    %v260 = vtanh.pop %v258
    %263 = vrot.lane.b32.xlu0 %v259, 32
    %v264 = vpop.permute.xlu0 %263
    %265 = vrot.lane.b32.xlu0 %v260, 32
    %v266 = vpop.permute.xlu0 %265
    %v269 = vmul.f32 %v219, %v264
    %v270 = vmul.f32 %v234, %v266
    %273 = vrot.lane.b32.xlu0 %v269, 80
    %v274 = vpop.permute.xlu0 %273
    %275 = vrot.lane.b32.xlu0 %v270, 80
    %v276 = vpop.permute.xlu0 %275
    %279 = vst.msk [vmem:[#allocation2] sm:$0xff] %vm168, %v274
    %280 = vst.msk [vmem:[#allocation2 + $0x8] sm:$0xff] %vm168, %v276
    %v281 = vsel %vm168, %v274, 0
    %v283 = vsel %vm168, %v276, 0
    %285 = vmatpush.msra.mxu0 0.0
    %286 = vmatpush.msra.mxu0 0.0
    %287 = vmatpush.msra.mxu0 0.0
    %288 = vmatpush.msra.mxu0 0.0
    %289 = vmatpush.msra.mxu0 0.0
    %290 = vmatpush.msra.mxu0 0.0
    %291 = vmatpush.msra.mxu0 0.0
    %292 = vmatpush.msra.mxu0 0.0
    %293 = vmatpush.msra.mxu0 0.0
    %294 = vmatpush.msra.mxu0 0.0
    %295 = vmatpush.msra.mxu0 0.0
    %296 = vmatpush.msra.mxu0 0.0
    %297 = vmatpush.msra.mxu0 0.0
    %298 = vmatpush.msra.mxu0 0.0
    %299 = vmatpush.msra.mxu0 %v29
    %300 = vmatpush.msra.mxu0 %v28
    %301 = vmatmul.f32.gmra.mxu0 %v281
    %v302 = vpop.f32.mrf.mxu0
    %v303 = vadd.f32 0.0, %v302
    %304 = vmatmul.f32.gmra.mxu0 %v283
    %v305 = vpop.f32.mrf.mxu0
    %v306 = vadd.f32 0.0, %v305
    %307 = vdwg.mxu0
    %v308 = vadd.f32 %v127, %v303
    %v309 = vadd.f32 %v130, %v306
    %v310 = vxor.u32 %v308, 2147483648
    %v311 = vxor.u32 %v309, 2147483648
    %v312 = vmul.f32 %v310, 1.442695
    %v313 = vpow.pop %v312
    %v314 = vmul.f32 %v311, 1.442695
    %v315 = vpow.pop %v314
    %v316 = vadd.f32 %v313, 1.0
    %v317 = vadd.f32 %v315, 1.0
    %v318 = vrcp.pop %v316
    %v319 = vmul.f32 %v316, %v318
    %v320 = vsub.f32 1.0, %v319
    %v321 = vmul.f32 %v318, %v320
    %v322 = vadd.f32 %v318, %v321
    %vm323 = vweird.f32 %v316
    %vm324 = vweird.f32 %v318
    %vm325 = vmor %vm323, %vm324
    %v326 = vsel %vm325, %v318, %v322
    %v327 = vand.u32 2147483647, %v316
    %vm328 = vcmp.eq.f32.partialorder %v327, 8.507059e+37
    %v329 = vand.u32 %v316, 2147483648
    %v330 = vor.u32 1.1754944e-38, %v329
    %v331 = vsel %vm328, %v330, %v326
    %v332 = vmul.f32 1.0, %v331
    %v333 = vrcp.pop %v317
    %v334 = vmul.f32 %v317, %v333
    %v335 = vsub.f32 1.0, %v334
    %v336 = vmul.f32 %v333, %v335
    %v337 = vadd.f32 %v333, %v336
    %vm338 = vweird.f32 %v317
    %vm339 = vweird.f32 %v333
    %vm340 = vmor %vm338, %vm339
    %v341 = vsel %vm340, %v333, %v337
    %v342 = vand.u32 2147483647, %v317
    %vm343 = vcmp.eq.f32.partialorder %v342, 8.507059e+37
    %v344 = vand.u32 %v317, 2147483648
    %v345 = vor.u32 1.1754944e-38, %v344
    %v346 = vsel %vm343, %v345, %v341
    %v347 = vmul.f32 1.0, %v346
    %v348 = vtanh.pop %v308
    %v349 = vtanh.pop %v309
    %v350 = vmul.f32 %v332, %v257
    %v351 = vmul.f32 %v347, %v258
    %354 = vrot.lane.b32.xlu0 %v348, 96
    %v355 = vpop.permute.xlu0 %354
    %356 = vrot.lane.b32.xlu0 %v349, 96
    %v357 = vpop.permute.xlu0 %356
    %v360 = vmul.f32 %v332, %v355
    %v361 = vmul.f32 %v347, %v357
    %364 = vrot.lane.b32.xlu0 %v360, 16
    %v365 = vpop.permute.xlu0 %364
    %366 = vrot.lane.b32.xlu0 %v361, 16
    %v367 = vpop.permute.xlu0 %366
    %v370 = vadd.f32 %v350, %v365
    %v371 = vadd.f32 %v351, %v367
    %v372 = vtanh.pop %v370
    %v373 = vtanh.pop %v371
    %376 = vrot.lane.b32.xlu0 %v372, 32
    %v377 = vpop.permute.xlu0 %376
    %378 = vrot.lane.b32.xlu0 %v373, 32
    %v379 = vpop.permute.xlu0 %378
    %v382 = vmul.f32 %v332, %v377
    %v383 = vmul.f32 %v347, %v379
    %386 = vrot.lane.b32.xlu0 %v382, 80
    %v387 = vpop.permute.xlu0 %386
    %388 = vrot.lane.b32.xlu0 %v383, 80
    %v389 = vpop.permute.xlu0 %388
    %392 = vst.msk [vmem:[#allocation2 + $0x10] sm:$0xff] %vm168, %v387
    %393 = vst.msk [vmem:[#allocation2 + $0x18] sm:$0xff] %vm168, %v389
    %v394 = vsel %vm168, %v387, 0
    %v396 = vsel %vm168, %v389, 0
    %398 = vmatpush.msra.mxu0 0.0
    %399 = vmatpush.msra.mxu0 0.0
    %400 = vmatpush.msra.mxu0 0.0
    %401 = vmatpush.msra.mxu0 0.0
    %402 = vmatpush.msra.mxu0 0.0
    %403 = vmatpush.msra.mxu0 0.0
    %404 = vmatpush.msra.mxu0 0.0
    %405 = vmatpush.msra.mxu0 0.0
    %406 = vmatpush.msra.mxu0 0.0
    %407 = vmatpush.msra.mxu0 0.0
    %408 = vmatpush.msra.mxu0 0.0
    %409 = vmatpush.msra.mxu0 0.0
    %410 = vmatpush.msra.mxu0 0.0
    %411 = vmatpush.msra.mxu0 0.0
    %412 = vmatpush.msra.mxu0 %v29
    %413 = vmatpush.msra.mxu0 %v28
    %414 = vmatmul.f32.gmra.mxu0 %v394
    %v415 = vpop.f32.mrf.mxu0
    %v416 = vadd.f32 0.0, %v415
    %417 = vmatmul.f32.gmra.mxu0 %v396
    %v418 = vpop.f32.mrf.mxu0
    %v419 = vadd.f32 0.0, %v418
    %420 = vdwg.mxu0
    %v421 = vadd.f32 %v133, %v416
    %v422 = vadd.f32 %v136, %v419
    %v423 = vxor.u32 %v421, 2147483648
    %v424 = vxor.u32 %v422, 2147483648
    %v425 = vmul.f32 %v423, 1.442695
    %v426 = vpow.pop %v425
    %v427 = vmul.f32 %v424, 1.442695
    %v428 = vpow.pop %v427
    %v429 = vadd.f32 %v426, 1.0
    %v430 = vadd.f32 %v428, 1.0
    %v431 = vrcp.pop %v429
    %v432 = vmul.f32 %v429, %v431
    %v433 = vsub.f32 1.0, %v432
    %v434 = vmul.f32 %v431, %v433
    %v435 = vadd.f32 %v431, %v434
    %vm436 = vweird.f32 %v429
    %vm437 = vweird.f32 %v431
    %vm438 = vmor %vm436, %vm437
    %v439 = vsel %vm438, %v431, %v435
    %v440 = vand.u32 2147483647, %v429
    %vm441 = vcmp.eq.f32.partialorder %v440, 8.507059e+37
    %v442 = vand.u32 %v429, 2147483648
    %v443 = vor.u32 1.1754944e-38, %v442
    %v444 = vsel %vm441, %v443, %v439
    %v445 = vmul.f32 1.0, %v444
    %v446 = vrcp.pop %v430
    %v447 = vmul.f32 %v430, %v446
    %v448 = vsub.f32 1.0, %v447
    %v449 = vmul.f32 %v446, %v448
    %v450 = vadd.f32 %v446, %v449
    %vm451 = vweird.f32 %v430
    %vm452 = vweird.f32 %v446
    %vm453 = vmor %vm451, %vm452
    %v454 = vsel %vm453, %v446, %v450
    %v455 = vand.u32 2147483647, %v430
    %vm456 = vcmp.eq.f32.partialorder %v455, 8.507059e+37
    %v457 = vand.u32 %v430, 2147483648
    %v458 = vor.u32 1.1754944e-38, %v457
    %v459 = vsel %vm456, %v458, %v454
    %v460 = vmul.f32 1.0, %v459
    %v461 = vtanh.pop %v421
    %v462 = vtanh.pop %v422
    %v463 = vmul.f32 %v445, %v370
    %v464 = vmul.f32 %v460, %v371
    %467 = vrot.lane.b32.xlu0 %v461, 96
    %v468 = vpop.permute.xlu0 %467
    %469 = vrot.lane.b32.xlu0 %v462, 96
    %v470 = vpop.permute.xlu0 %469
    %v473 = vmul.f32 %v445, %v468
    %v474 = vmul.f32 %v460, %v470
    %477 = vrot.lane.b32.xlu0 %v473, 16
    %v478 = vpop.permute.xlu0 %477
    %479 = vrot.lane.b32.xlu0 %v474, 16
    %v480 = vpop.permute.xlu0 %479
    %v483 = vadd.f32 %v463, %v478
    %v484 = vadd.f32 %v464, %v480
    %v485 = vtanh.pop %v483
    %v486 = vtanh.pop %v484
    %489 = vrot.lane.b32.xlu0 %v485, 32
    %v490 = vpop.permute.xlu0 %489
    %491 = vrot.lane.b32.xlu0 %v486, 32
    %v492 = vpop.permute.xlu0 %491
    %v495 = vmul.f32 %v445, %v490
    %v496 = vmul.f32 %v460, %v492
    %499 = vrot.lane.b32.xlu0 %v495, 80
    %v500 = vpop.permute.xlu0 %499
    %501 = vrot.lane.b32.xlu0 %v496, 80
    %v502 = vpop.permute.xlu0 %501
    %505 = vst.msk [vmem:[#allocation2 + $0x20] sm:$0xff] %vm168, %v500
    %506 = vst.msk [vmem:[#allocation2 + $0x28] sm:$0xff] %vm168, %v502
    %v507 = vsel %vm168, %v500, 0
    %v509 = vsel %vm168, %v502, 0
    %511 = vmatpush.msra.mxu0 0.0
    %512 = vmatpush.msra.mxu0 0.0
    %513 = vmatpush.msra.mxu0 0.0
    %514 = vmatpush.msra.mxu0 0.0
    %515 = vmatpush.msra.mxu0 0.0
    %516 = vmatpush.msra.mxu0 0.0
    %517 = vmatpush.msra.mxu0 0.0
    %518 = vmatpush.msra.mxu0 0.0
    %519 = vmatpush.msra.mxu0 0.0
    %520 = vmatpush.msra.mxu0 0.0
    %521 = vmatpush.msra.mxu0 0.0
    %522 = vmatpush.msra.mxu0 0.0
    %523 = vmatpush.msra.mxu0 0.0
    %524 = vmatpush.msra.mxu0 0.0
    %525 = vmatpush.msra.mxu0 %v29
    %526 = vmatpush.msra.mxu0 %v28
    %527 = vmatmul.f32.gmra.mxu0 %v507
    %v528 = vpop.f32.mrf.mxu0
    %v529 = vadd.f32 0.0, %v528
    %530 = vmatmul.f32.gmra.mxu0 %v509
    %v531 = vpop.f32.mrf.mxu0
    %v532 = vadd.f32 0.0, %v531
    %533 = vdwg.mxu0
    %v534 = vadd.f32 %v139, %v529
    %v535 = vadd.f32 %v142, %v532
    %v536 = vxor.u32 %v534, 2147483648
    %v537 = vxor.u32 %v535, 2147483648
    %v538 = vmul.f32 %v536, 1.442695
    %v539 = vpow.pop %v538
    %v540 = vmul.f32 %v537, 1.442695
    %v541 = vpow.pop %v540
    %v542 = vadd.f32 %v539, 1.0
    %v543 = vadd.f32 %v541, 1.0
    %v544 = vrcp.pop %v542
    %v545 = vmul.f32 %v542, %v544
    %v546 = vsub.f32 1.0, %v545
    %v547 = vmul.f32 %v544, %v546
    %v548 = vadd.f32 %v544, %v547
    %vm549 = vweird.f32 %v542
    %vm550 = vweird.f32 %v544
    %vm551 = vmor %vm549, %vm550
    %v552 = vsel %vm551, %v544, %v548
    %v553 = vand.u32 2147483647, %v542
    %vm554 = vcmp.eq.f32.partialorder %v553, 8.507059e+37
    %v555 = vand.u32 %v542, 2147483648
    %v556 = vor.u32 1.1754944e-38, %v555
    %v557 = vsel %vm554, %v556, %v552
    %v558 = vmul.f32 1.0, %v557
    %v559 = vrcp.pop %v543
    %v560 = vmul.f32 %v543, %v559
    %v561 = vsub.f32 1.0, %v560
    %v562 = vmul.f32 %v559, %v561
    %v563 = vadd.f32 %v559, %v562
    %vm564 = vweird.f32 %v543
    %vm565 = vweird.f32 %v559
    %vm566 = vmor %vm564, %vm565
    %v567 = vsel %vm566, %v559, %v563
    %v568 = vand.u32 2147483647, %v543
    %vm569 = vcmp.eq.f32.partialorder %v568, 8.507059e+37
    %v570 = vand.u32 %v543, 2147483648
    %v571 = vor.u32 1.1754944e-38, %v570
    %v572 = vsel %vm569, %v571, %v567
    %v573 = vmul.f32 1.0, %v572
    %v574 = vtanh.pop %v534
    %v575 = vtanh.pop %v535
    %v576 = vmul.f32 %v558, %v483
    %v577 = vmul.f32 %v573, %v484
    %580 = vrot.lane.b32.xlu0 %v574, 96
    %v581 = vpop.permute.xlu0 %580
    %582 = vrot.lane.b32.xlu0 %v575, 96
    %v583 = vpop.permute.xlu0 %582
    %v586 = vmul.f32 %v558, %v581
    %v587 = vmul.f32 %v573, %v583
    %590 = vrot.lane.b32.xlu0 %v586, 16
    %v591 = vpop.permute.xlu0 %590
    %592 = vrot.lane.b32.xlu0 %v587, 16
    %v593 = vpop.permute.xlu0 %592
    %v596 = vadd.f32 %v576, %v591
    %v597 = vadd.f32 %v577, %v593
    %v598 = vtanh.pop %v596
    %v599 = vtanh.pop %v597
    %602 = vrot.lane.b32.xlu0 %v598, 32
    %v603 = vpop.permute.xlu0 %602
    %604 = vrot.lane.b32.xlu0 %v599, 32
    %v605 = vpop.permute.xlu0 %604
    %v608 = vmul.f32 %v558, %v603
    %v609 = vmul.f32 %v573, %v605
    %612 = vrot.lane.b32.xlu0 %v608, 80
    %v613 = vpop.permute.xlu0 %612
    %614 = vrot.lane.b32.xlu0 %v609, 80
    %v615 = vpop.permute.xlu0 %614
    %618 = vst.msk [vmem:[#allocation2 + $0x30] sm:$0xff] %vm168, %v613
    %619 = vst.msk [vmem:[#allocation2 + $0x38] sm:$0xff] %vm168, %v615
    %v620 = vsel %vm168, %v613, 0
    %v622 = vsel %vm168, %v615, 0
    %624 = vmatpush.msra.mxu0 0.0
    %625 = vmatpush.msra.mxu0 0.0
    %626 = vmatpush.msra.mxu0 0.0
    %627 = vmatpush.msra.mxu0 0.0
    %628 = vmatpush.msra.mxu0 0.0
    %629 = vmatpush.msra.mxu0 0.0
    %630 = vmatpush.msra.mxu0 0.0
    %631 = vmatpush.msra.mxu0 0.0
    %632 = vmatpush.msra.mxu0 0.0
    %633 = vmatpush.msra.mxu0 0.0
    %634 = vmatpush.msra.mxu0 0.0
    %635 = vmatpush.msra.mxu0 0.0
    %636 = vmatpush.msra.mxu0 0.0
    %637 = vmatpush.msra.mxu0 0.0
    %638 = vmatpush.msra.mxu0 %v29
    %639 = vmatpush.msra.mxu0 %v28
    %640 = vmatmul.f32.gmra.mxu0 %v620
    %v641 = vpop.f32.mrf.mxu0
    %v642 = vadd.f32 0.0, %v641
    %643 = vmatmul.f32.gmra.mxu0 %v622
    %v644 = vpop.f32.mrf.mxu0
    %v645 = vadd.f32 0.0, %v644
    %646 = vdwg.mxu0
    %v647 = vadd.f32 %v145, %v642
    %v648 = vadd.f32 %v148, %v645
    %v649 = vxor.u32 %v647, 2147483648
    %v650 = vxor.u32 %v648, 2147483648
    %v651 = vmul.f32 %v649, 1.442695
    %v652 = vpow.pop %v651
    %v653 = vmul.f32 %v650, 1.442695
    %v654 = vpow.pop %v653
    %v655 = vadd.f32 %v652, 1.0
    %v656 = vadd.f32 %v654, 1.0
    %v657 = vrcp.pop %v655
    %v658 = vmul.f32 %v655, %v657
    %v659 = vsub.f32 1.0, %v658
    %v660 = vmul.f32 %v657, %v659
    %v661 = vadd.f32 %v657, %v660
    %vm662 = vweird.f32 %v655
    %vm663 = vweird.f32 %v657
    %vm664 = vmor %vm662, %vm663
    %v665 = vsel %vm664, %v657, %v661
    %v666 = vand.u32 2147483647, %v655
    %vm667 = vcmp.eq.f32.partialorder %v666, 8.507059e+37
    %v668 = vand.u32 %v655, 2147483648
    %v669 = vor.u32 1.1754944e-38, %v668
    %v670 = vsel %vm667, %v669, %v665
    %v671 = vmul.f32 1.0, %v670
    %v672 = vrcp.pop %v656
    %v673 = vmul.f32 %v656, %v672
    %v674 = vsub.f32 1.0, %v673
    %v675 = vmul.f32 %v672, %v674
    %v676 = vadd.f32 %v672, %v675
    %vm677 = vweird.f32 %v656
    %vm678 = vweird.f32 %v672
    %vm679 = vmor %vm677, %vm678
    %v680 = vsel %vm679, %v672, %v676
    %v681 = vand.u32 2147483647, %v656
    %vm682 = vcmp.eq.f32.partialorder %v681, 8.507059e+37
    %v683 = vand.u32 %v656, 2147483648
    %v684 = vor.u32 1.1754944e-38, %v683
    %v685 = vsel %vm682, %v684, %v680
    %v686 = vmul.f32 1.0, %v685
    %v687 = vtanh.pop %v647
    %v688 = vtanh.pop %v648
    %v689 = vmul.f32 %v671, %v596
    %v690 = vmul.f32 %v686, %v597
    %693 = vrot.lane.b32.xlu0 %v687, 96
    %v694 = vpop.permute.xlu0 %693
    %695 = vrot.lane.b32.xlu0 %v688, 96
    %v696 = vpop.permute.xlu0 %695
    %v699 = vmul.f32 %v671, %v694
    %v700 = vmul.f32 %v686, %v696
    %703 = vrot.lane.b32.xlu0 %v699, 16
    %v704 = vpop.permute.xlu0 %703
    %705 = vrot.lane.b32.xlu0 %v700, 16
    %v706 = vpop.permute.xlu0 %705
    %v709 = vadd.f32 %v689, %v704
    %v710 = vadd.f32 %v690, %v706
    %v711 = vtanh.pop %v709
    %v712 = vtanh.pop %v710
    %715 = vrot.lane.b32.xlu0 %v711, 32
    %v716 = vpop.permute.xlu0 %715
    %717 = vrot.lane.b32.xlu0 %v712, 32
    %v718 = vpop.permute.xlu0 %717
    %v721 = vmul.f32 %v671, %v716
    %v722 = vmul.f32 %v686, %v718
    %725 = vrot.lane.b32.xlu0 %v721, 80
    %v726 = vpop.permute.xlu0 %725
    %727 = vrot.lane.b32.xlu0 %v722, 80
    %v728 = vpop.permute.xlu0 %727
    %731 = vst.msk [vmem:[#allocation2 + $0x40] sm:$0xff] %vm168, %v726
    %732 = vst.msk [vmem:[#allocation2 + $0x48] sm:$0xff] %vm168, %v728
    %v733 = vsel %vm168, %v726, 0
    %v735 = vsel %vm168, %v728, 0
    %737 = vmatpush.msra.mxu0 0.0
    %738 = vmatpush.msra.mxu0 0.0
    %739 = vmatpush.msra.mxu0 0.0
    %740 = vmatpush.msra.mxu0 0.0
    %741 = vmatpush.msra.mxu0 0.0
    %742 = vmatpush.msra.mxu0 0.0
    %743 = vmatpush.msra.mxu0 0.0
    %744 = vmatpush.msra.mxu0 0.0
    %745 = vmatpush.msra.mxu0 0.0
    %746 = vmatpush.msra.mxu0 0.0
    %747 = vmatpush.msra.mxu0 0.0
    %748 = vmatpush.msra.mxu0 0.0
    %749 = vmatpush.msra.mxu0 0.0
    %750 = vmatpush.msra.mxu0 0.0
    %751 = vmatpush.msra.mxu0 %v29
    %752 = vmatpush.msra.mxu0 %v28
    %753 = vmatmul.f32.gmra.mxu0 %v733
    %v754 = vpop.f32.mrf.mxu0
    %v755 = vadd.f32 0.0, %v754
    %756 = vmatmul.f32.gmra.mxu0 %v735
    %v757 = vpop.f32.mrf.mxu0
    %v758 = vadd.f32 0.0, %v757
    %759 = vdwg.mxu0
    %v760 = vadd.f32 %v151, %v755
    %v761 = vadd.f32 %v154, %v758
    %v762 = vxor.u32 %v760, 2147483648
    %v763 = vxor.u32 %v761, 2147483648
    %v764 = vmul.f32 %v762, 1.442695
    %v765 = vpow.pop %v764
    %v766 = vmul.f32 %v763, 1.442695
    %v767 = vpow.pop %v766
    %v768 = vadd.f32 %v765, 1.0
    %v769 = vadd.f32 %v767, 1.0
    %v770 = vrcp.pop %v768
    %v771 = vmul.f32 %v768, %v770
    %v772 = vsub.f32 1.0, %v771
    %v773 = vmul.f32 %v770, %v772
    %v774 = vadd.f32 %v770, %v773
    %vm775 = vweird.f32 %v768
    %vm776 = vweird.f32 %v770
    %vm777 = vmor %vm775, %vm776
    %v778 = vsel %vm777, %v770, %v774
    %v779 = vand.u32 2147483647, %v768
    %vm780 = vcmp.eq.f32.partialorder %v779, 8.507059e+37
    %v781 = vand.u32 %v768, 2147483648
    %v782 = vor.u32 1.1754944e-38, %v781
    %v783 = vsel %vm780, %v782, %v778
    %v784 = vmul.f32 1.0, %v783
    %v785 = vrcp.pop %v769
    %v786 = vmul.f32 %v769, %v785
    %v787 = vsub.f32 1.0, %v786
    %v788 = vmul.f32 %v785, %v787
    %v789 = vadd.f32 %v785, %v788
    %vm790 = vweird.f32 %v769
    %vm791 = vweird.f32 %v785
    %vm792 = vmor %vm790, %vm791
    %v793 = vsel %vm792, %v785, %v789
    %v794 = vand.u32 2147483647, %v769
    %vm795 = vcmp.eq.f32.partialorder %v794, 8.507059e+37
    %v796 = vand.u32 %v769, 2147483648
    %v797 = vor.u32 1.1754944e-38, %v796
    %v798 = vsel %vm795, %v797, %v793
    %v799 = vmul.f32 1.0, %v798
    %v800 = vtanh.pop %v760
    %v801 = vtanh.pop %v761
    %v802 = vmul.f32 %v784, %v709
    %v803 = vmul.f32 %v799, %v710
    %806 = vrot.lane.b32.xlu0 %v800, 96
    %v807 = vpop.permute.xlu0 %806
    %808 = vrot.lane.b32.xlu0 %v801, 96
    %v809 = vpop.permute.xlu0 %808
    %v812 = vmul.f32 %v784, %v807
    %v813 = vmul.f32 %v799, %v809
    %816 = vrot.lane.b32.xlu0 %v812, 16
    %v817 = vpop.permute.xlu0 %816
    %818 = vrot.lane.b32.xlu0 %v813, 16
    %v819 = vpop.permute.xlu0 %818
    %v822 = vadd.f32 %v802, %v817
    %v823 = vadd.f32 %v803, %v819
    %v824 = vtanh.pop %v822
    %v825 = vtanh.pop %v823
    %828 = vrot.lane.b32.xlu0 %v824, 32
    %v829 = vpop.permute.xlu0 %828
    %830 = vrot.lane.b32.xlu0 %v825, 32
    %v831 = vpop.permute.xlu0 %830
    %v834 = vmul.f32 %v784, %v829
    %v835 = vmul.f32 %v799, %v831
    %838 = vrot.lane.b32.xlu0 %v834, 80
    %v839 = vpop.permute.xlu0 %838
    %840 = vrot.lane.b32.xlu0 %v835, 80
    %v841 = vpop.permute.xlu0 %840
    %844 = vst.msk [vmem:[#allocation2 + $0x50] sm:$0xff] %vm168, %v839
    %845 = vst.msk [vmem:[#allocation2 + $0x58] sm:$0xff] %vm168, %v841
    %v846 = vsel %vm168, %v839, 0
    %v848 = vsel %vm168, %v841, 0
    %850 = vmatpush.msra.mxu0 0.0
    %851 = vmatpush.msra.mxu0 0.0
    %852 = vmatpush.msra.mxu0 0.0
    %853 = vmatpush.msra.mxu0 0.0
    %854 = vmatpush.msra.mxu0 0.0
    %855 = vmatpush.msra.mxu0 0.0
    %856 = vmatpush.msra.mxu0 0.0
    %857 = vmatpush.msra.mxu0 0.0
    %858 = vmatpush.msra.mxu0 0.0
    %859 = vmatpush.msra.mxu0 0.0
    %860 = vmatpush.msra.mxu0 0.0
    %861 = vmatpush.msra.mxu0 0.0
    %862 = vmatpush.msra.mxu0 0.0
    %863 = vmatpush.msra.mxu0 0.0
    %864 = vmatpush.msra.mxu0 %v29
    %865 = vmatpush.msra.mxu0 %v28
    %866 = vmatmul.f32.gmra.mxu0 %v846
    %v867 = vpop.f32.mrf.mxu0
    %v868 = vadd.f32 0.0, %v867
    %869 = vmatmul.f32.gmra.mxu0 %v848
    %v870 = vpop.f32.mrf.mxu0
    %v871 = vadd.f32 0.0, %v870
    %872 = vdwg.mxu0
    %v873 = vadd.f32 %v157, %v868
    %v874 = vadd.f32 %v160, %v871
    %v875 = vxor.u32 %v873, 2147483648
    %v876 = vxor.u32 %v874, 2147483648
    %v877 = vmul.f32 %v875, 1.442695
    %v878 = vpow.pop %v877
    %v879 = vmul.f32 %v876, 1.442695
    %v880 = vpow.pop %v879
    %v881 = vadd.f32 %v878, 1.0
    %v882 = vadd.f32 %v880, 1.0
    %v883 = vrcp.pop %v881
    %v884 = vmul.f32 %v881, %v883
    %v885 = vsub.f32 1.0, %v884
    %v886 = vmul.f32 %v883, %v885
    %v887 = vadd.f32 %v883, %v886
    %vm888 = vweird.f32 %v881
    %vm889 = vweird.f32 %v883
    %vm890 = vmor %vm888, %vm889
    %v891 = vsel %vm890, %v883, %v887
    %v892 = vand.u32 2147483647, %v881
    %vm893 = vcmp.eq.f32.partialorder %v892, 8.507059e+37
    %v894 = vand.u32 %v881, 2147483648
    %v895 = vor.u32 1.1754944e-38, %v894
    %v896 = vsel %vm893, %v895, %v891
    %v897 = vmul.f32 1.0, %v896
    %v898 = vrcp.pop %v882
    %v899 = vmul.f32 %v882, %v898
    %v900 = vsub.f32 1.0, %v899
    %v901 = vmul.f32 %v898, %v900
    %v902 = vadd.f32 %v898, %v901
    %vm903 = vweird.f32 %v882
    %vm904 = vweird.f32 %v898
    %vm905 = vmor %vm903, %vm904
    %v906 = vsel %vm905, %v898, %v902
    %v907 = vand.u32 2147483647, %v882
    %vm908 = vcmp.eq.f32.partialorder %v907, 8.507059e+37
    %v909 = vand.u32 %v882, 2147483648
    %v910 = vor.u32 1.1754944e-38, %v909
    %v911 = vsel %vm908, %v910, %v906
    %v912 = vmul.f32 1.0, %v911
    %v913 = vtanh.pop %v873
    %v914 = vtanh.pop %v874
    %v915 = vmul.f32 %v897, %v822
    %v916 = vmul.f32 %v912, %v823
    %919 = vrot.lane.b32.xlu0 %v913, 96
    %v920 = vpop.permute.xlu0 %919
    %921 = vrot.lane.b32.xlu0 %v914, 96
    %v922 = vpop.permute.xlu0 %921
    %v925 = vmul.f32 %v897, %v920
    %v926 = vmul.f32 %v912, %v922
    %929 = vrot.lane.b32.xlu0 %v925, 16
    %v930 = vpop.permute.xlu0 %929
    %931 = vrot.lane.b32.xlu0 %v926, 16
    %v932 = vpop.permute.xlu0 %931
    %v935 = vadd.f32 %v915, %v930
    %v936 = vadd.f32 %v916, %v932
    %v937 = vtanh.pop %v935
    %v938 = vtanh.pop %v936
    %941 = vrot.lane.b32.xlu0 %v937, 32
    %v942 = vpop.permute.xlu0 %941
    %943 = vrot.lane.b32.xlu0 %v938, 32
    %v944 = vpop.permute.xlu0 %943
    %v947 = vmul.f32 %v897, %v942
    %v948 = vmul.f32 %v912, %v944
    %951 = vrot.lane.b32.xlu0 %v947, 80
    %v952 = vpop.permute.xlu0 %951
    %953 = vrot.lane.b32.xlu0 %v948, 80
    %v954 = vpop.permute.xlu0 %953
    %957 = vst.msk [vmem:[#allocation2 + $0x60] sm:$0xff] %vm168, %v952
    %958 = vst.msk [vmem:[#allocation2 + $0x68] sm:$0xff] %vm168, %v954
    %v959 = vsel %vm168, %v952, 0
    %v961 = vsel %vm168, %v954, 0
    %963 = vmatpush.msra.mxu0 0.0
    %964 = vmatpush.msra.mxu0 0.0
    %965 = vmatpush.msra.mxu0 0.0
    %966 = vmatpush.msra.mxu0 0.0
    %967 = vmatpush.msra.mxu0 0.0
    %968 = vmatpush.msra.mxu0 0.0
    %969 = vmatpush.msra.mxu0 0.0
    %970 = vmatpush.msra.mxu0 0.0
    %971 = vmatpush.msra.mxu0 0.0
    %972 = vmatpush.msra.mxu0 0.0
    %973 = vmatpush.msra.mxu0 0.0
    %974 = vmatpush.msra.mxu0 0.0
    %975 = vmatpush.msra.mxu0 0.0
    %976 = vmatpush.msra.mxu0 0.0
    %977 = vmatpush.msra.mxu0 %v29
    %978 = vmatpush.msra.mxu0 %v28
    %979 = vmatmul.f32.gmra.mxu0 %v959
    %v980 = vpop.f32.mrf.mxu0
    %v981 = vadd.f32 0.0, %v980
    %982 = vmatmul.f32.gmra.mxu0 %v961
    %v983 = vpop.f32.mrf.mxu0
    %v984 = vadd.f32 0.0, %v983
    %985 = vdwg.mxu0
    %v986 = vadd.f32 %v163, %v981
    %v987 = vadd.f32 %v166, %v984
    %v988 = vxor.u32 %v986, 2147483648
    %v989 = vxor.u32 %v987, 2147483648
    %v990 = vmul.f32 %v988, 1.442695
    %v991 = vpow.pop %v990
    %v992 = vmul.f32 %v989, 1.442695
    %v993 = vpow.pop %v992
    %v994 = vadd.f32 %v991, 1.0
    %v995 = vadd.f32 %v993, 1.0
    %v996 = vrcp.pop %v994
    %v997 = vmul.f32 %v994, %v996
    %v998 = vsub.f32 1.0, %v997
    %v999 = vmul.f32 %v996, %v998
    %v1000 = vadd.f32 %v996, %v999
    %vm1001 = vweird.f32 %v994
    %vm1002 = vweird.f32 %v996
    %vm1003 = vmor %vm1001, %vm1002
    %v1004 = vsel %vm1003, %v996, %v1000
    %v1005 = vand.u32 2147483647, %v994
    %vm1006 = vcmp.eq.f32.partialorder %v1005, 8.507059e+37
    %v1007 = vand.u32 %v994, 2147483648
    %v1008 = vor.u32 1.1754944e-38, %v1007
    %v1009 = vsel %vm1006, %v1008, %v1004
    %v1010 = vmul.f32 1.0, %v1009
    %v1011 = vrcp.pop %v995
    %v1012 = vmul.f32 %v995, %v1011
    %v1013 = vsub.f32 1.0, %v1012
    %v1014 = vmul.f32 %v1011, %v1013
    %v1015 = vadd.f32 %v1011, %v1014
    %vm1016 = vweird.f32 %v995
    %vm1017 = vweird.f32 %v1011
    %vm1018 = vmor %vm1016, %vm1017
    %v1019 = vsel %vm1018, %v1011, %v1015
    %v1020 = vand.u32 2147483647, %v995
    %vm1021 = vcmp.eq.f32.partialorder %v1020, 8.507059e+37
    %v1022 = vand.u32 %v995, 2147483648
    %v1023 = vor.u32 1.1754944e-38, %v1022
    %v1024 = vsel %vm1021, %v1023, %v1019
    %v1025 = vmul.f32 1.0, %v1024
    %v1026 = vtanh.pop %v986
    %v1027 = vtanh.pop %v987
    %v1028 = vmul.f32 %v1010, %v935
    %v1029 = vmul.f32 %v1025, %v936
    %1032 = vrot.lane.b32.xlu0 %v1026, 96
    %v1033 = vpop.permute.xlu0 %1032
    %1034 = vrot.lane.b32.xlu0 %v1027, 96
    %v1035 = vpop.permute.xlu0 %1034
    %v1038 = vmul.f32 %v1010, %v1033
    %v1039 = vmul.f32 %v1025, %v1035
    %1042 = vrot.lane.b32.xlu0 %v1038, 16
    %v1043 = vpop.permute.xlu0 %1042
    %1044 = vrot.lane.b32.xlu0 %v1039, 16
    %v1045 = vpop.permute.xlu0 %1044
    %v1048 = vadd.f32 %v1028, %v1043
    %v1049 = vadd.f32 %v1029, %v1045
    %v1050 = vtanh.pop %v1048
    %v1051 = vtanh.pop %v1049
    %1054 = vrot.lane.b32.xlu0 %v1050, 32
    %v1055 = vpop.permute.xlu0 %1054
    %1056 = vrot.lane.b32.xlu0 %v1051, 32
    %v1057 = vpop.permute.xlu0 %1056
    %v1060 = vmul.f32 %v1010, %v1055
    %v1061 = vmul.f32 %v1025, %v1057
    %1064 = vrot.lane.b32.xlu0 %v1060, 80
    %v1065 = vpop.permute.xlu0 %1064
    %1066 = vrot.lane.b32.xlu0 %v1061, 80
    %v1067 = vpop.permute.xlu0 %1066
    %1070 = vst.msk [vmem:[#allocation2 + $0x70] sm:$0xff] %vm168, %v1065
    %1071 = vst.msk [vmem:[#allocation2 + $0x78] sm:$0xff] %vm168, %v1067
    %v1072 = vld [vmem:[%s4] sm:$0xff]
    %v1073 = vld [vmem:[%s4 + $0x8] sm:$0xff]
    %v1074 = vld [vmem:[%s5] sm:$0xff]
    %v1075 = vld [vmem:[%s5 + $0x8] sm:$0xff]
    %v1076 = vld [vmem:[%s6] sm:$0x1]
    %v1077 = vld [vmem:[#allocation2] sm:$0xff]
    %v1078 = vld [vmem:[#allocation2 + $0x8] sm:$0xff]
    %v1079 = vld [vmem:[#allocation2 + $0x10] sm:$0xff]
    %v1080 = vld [vmem:[#allocation2 + $0x18] sm:$0xff]
    %v1081 = vld [vmem:[#allocation2 + $0x20] sm:$0xff]
    %v1082 = vld [vmem:[#allocation2 + $0x28] sm:$0xff]
    %v1083 = vld [vmem:[#allocation2 + $0x30] sm:$0xff]
    %v1084 = vld [vmem:[#allocation2 + $0x38] sm:$0xff]
    %v1085 = vld [vmem:[#allocation2 + $0x40] sm:$0xff]
    %v1086 = vld [vmem:[#allocation2 + $0x48] sm:$0xff]
    %v1087 = vld [vmem:[#allocation2 + $0x50] sm:$0xff]
    %v1088 = vld [vmem:[#allocation2 + $0x58] sm:$0xff]
    %v1089 = vld [vmem:[#allocation2 + $0x60] sm:$0xff]
    %v1090 = vld [vmem:[#allocation2 + $0x68] sm:$0xff]
    %v1091 = vld [vmem:[#allocation2 + $0x70] sm:$0xff]
    %v1092 = vld [vmem:[#allocation2 + $0x78] sm:$0xff]
    %v1094 = vperm.slane %v1076, 0
    %v1097 = vsel %vm168, %v1077, 0
    %v1100 = vsel %vm168, %v1078, 0
    %v1103 = vsel %vm168, %v1079, 0
    %v1106 = vsel %vm168, %v1080, 0
    %v1109 = vsel %vm168, %v1081, 0
    %v1112 = vsel %vm168, %v1082, 0
    %v1115 = vsel %vm168, %v1083, 0
    %v1118 = vsel %vm168, %v1084, 0
    %v1121 = vsel %vm168, %v1085, 0
    %v1124 = vsel %vm168, %v1086, 0
    %v1127 = vsel %vm168, %v1087, 0
    %v1130 = vsel %vm168, %v1088, 0
    %v1133 = vsel %vm168, %v1089, 0
    %v1136 = vsel %vm168, %v1090, 0
    %v1139 = vsel %vm168, %v1091, 0
    %v1142 = vsel %vm168, %v1092, 0
    %1144 = vmatpush.msra.mxu0 0.0
    %1145 = vmatpush.msra.mxu0 0.0
    %1146 = vmatpush.msra.mxu0 0.0
    %1147 = vmatpush.msra.mxu0 0.0
    %1148 = vmatpush.msra.mxu0 0.0
    %1149 = vmatpush.msra.mxu0 0.0
    %1150 = vmatpush.msra.mxu0 0.0
    %1151 = vmatpush.msra.mxu0 0.0
    %1152 = vmatpush.msra.mxu0 0.0
    %1153 = vmatpush.msra.mxu0 0.0
    %1154 = vmatpush.msra.mxu0 0.0
    %1155 = vmatpush.msra.mxu0 0.0
    %1156 = vmatpush.msra.mxu0 0.0
    %1157 = vmatpush.msra.mxu0 0.0
    %1158 = vmatpush.msra.mxu0 %v1073
    %1159 = vmatpush.msra.mxu0 %v1072
    %1160 = vmatmul.f32.gmra.mxu0 %v1097
    %v1161 = vpop.f32.mrf.mxu0
    %v1162 = vadd.f32 %v1094, %v1161
    %1163 = vmatmul.f32.gmra.mxu0 %v1100
    %v1164 = vpop.f32.mrf.mxu0
    %v1165 = vadd.f32 %v1094, %v1164
    %1166 = vmatmul.f32.gmra.mxu0 %v1103
    %v1167 = vpop.f32.mrf.mxu0
    %v1168 = vadd.f32 %v1094, %v1167
    %1169 = vmatmul.f32.gmra.mxu0 %v1106
    %v1170 = vpop.f32.mrf.mxu0
    %v1171 = vadd.f32 %v1094, %v1170
    %1172 = vmatmul.f32.gmra.mxu0 %v1109
    %v1173 = vpop.f32.mrf.mxu0
    %v1174 = vadd.f32 %v1094, %v1173
    %1175 = vmatmul.f32.gmra.mxu0 %v1112
    %v1176 = vpop.f32.mrf.mxu0
    %v1177 = vadd.f32 %v1094, %v1176
    %1178 = vmatmul.f32.gmra.mxu0 %v1115
    %v1179 = vpop.f32.mrf.mxu0
    %v1180 = vadd.f32 %v1094, %v1179
    %1181 = vmatmul.f32.gmra.mxu0 %v1118
    %v1182 = vpop.f32.mrf.mxu0
    %v1183 = vadd.f32 %v1094, %v1182
    %1184 = vmatmul.f32.gmra.mxu0 %v1121
    %v1185 = vpop.f32.mrf.mxu0
    %v1186 = vadd.f32 %v1094, %v1185
    %1187 = vmatmul.f32.gmra.mxu0 %v1124
    %v1188 = vpop.f32.mrf.mxu0
    %v1189 = vadd.f32 %v1094, %v1188
    %1190 = vmatmul.f32.gmra.mxu0 %v1127
    %v1191 = vpop.f32.mrf.mxu0
    %v1192 = vadd.f32 %v1094, %v1191
    %1193 = vmatmul.f32.gmra.mxu0 %v1130
    %v1194 = vpop.f32.mrf.mxu0
    %v1195 = vadd.f32 %v1094, %v1194
    %1196 = vmatmul.f32.gmra.mxu0 %v1133
    %v1197 = vpop.f32.mrf.mxu0
    %v1198 = vadd.f32 %v1094, %v1197
    %1199 = vmatmul.f32.gmra.mxu0 %v1136
    %v1200 = vpop.f32.mrf.mxu0
    %v1201 = vadd.f32 %v1094, %v1200
    %1202 = vmatmul.f32.gmra.mxu0 %v1139
    %v1203 = vpop.f32.mrf.mxu0
    %v1204 = vadd.f32 %v1094, %v1203
    %1205 = vmatmul.f32.gmra.mxu0 %v1142
    %v1206 = vpop.f32.mrf.mxu0
    %v1207 = vadd.f32 %v1094, %v1206
    %1208 = vdwg.mxu0
    %1209 = vmatpush.msra.mxu0 0.0
    %1210 = vmatpush.msra.mxu0 0.0
    %1211 = vmatpush.msra.mxu0 0.0
    %1212 = vmatpush.msra.mxu0 0.0
    %1213 = vmatpush.msra.mxu0 0.0
    %1214 = vmatpush.msra.mxu0 0.0
    %1215 = vmatpush.msra.mxu0 0.0
    %1216 = vmatpush.msra.mxu0 0.0
    %1217 = vmatpush.msra.mxu0 0.0
    %1218 = vmatpush.msra.mxu0 0.0
    %1219 = vmatpush.msra.mxu0 0.0
    %1220 = vmatpush.msra.mxu0 0.0
    %1221 = vmatpush.msra.mxu0 0.0
    %1222 = vmatpush.msra.mxu0 0.0
    %1223 = vmatpush.msra.mxu0 %v1075
    %1224 = vmatpush.msra.mxu0 %v1074
    %1225 = vmatmul.f32.gmra.mxu0 %v170
    %v1226 = vpop.f32.mrf.mxu0
    %v1227 = vadd.f32 0.0, %v1226
    %1228 = vmatmul.f32.gmra.mxu0 %v170
    %v1229 = vpop.f32.mrf.mxu0
    %v1230 = vadd.f32 0.0, %v1229
    %1231 = vdwg.mxu0
    %v1232 = vadd.f32 %v1162, %v1227
    %v1233 = vadd.f32 %v1165, %v1230
    %v1234 = vxor.u32 %v1232, 2147483648
    %v1235 = vxor.u32 %v1233, 2147483648
    %v1236 = vmul.f32 %v1234, 1.442695
    %v1237 = vpow.pop %v1236
    %v1238 = vmul.f32 %v1235, 1.442695
    %v1239 = vpow.pop %v1238
    %v1240 = vadd.f32 %v1237, 1.0
    %v1241 = vadd.f32 %v1239, 1.0
    %v1242 = vrcp.pop %v1240
    %v1243 = vmul.f32 %v1240, %v1242
    %v1244 = vsub.f32 1.0, %v1243
    %v1245 = vmul.f32 %v1242, %v1244
    %v1246 = vadd.f32 %v1242, %v1245
    %vm1247 = vweird.f32 %v1240
    %vm1248 = vweird.f32 %v1242
    %vm1249 = vmor %vm1247, %vm1248
    %v1250 = vsel %vm1249, %v1242, %v1246
    %v1251 = vand.u32 2147483647, %v1240
    %vm1252 = vcmp.eq.f32.partialorder %v1251, 8.507059e+37
    %v1253 = vand.u32 %v1240, 2147483648
    %v1254 = vor.u32 1.1754944e-38, %v1253
    %v1255 = vsel %vm1252, %v1254, %v1250
    %v1256 = vmul.f32 1.0, %v1255
    %v1257 = vrcp.pop %v1241
    %v1258 = vmul.f32 %v1241, %v1257
    %v1259 = vsub.f32 1.0, %v1258
    %v1260 = vmul.f32 %v1257, %v1259
    %v1261 = vadd.f32 %v1257, %v1260
    %vm1262 = vweird.f32 %v1241
    %vm1263 = vweird.f32 %v1257
    %vm1264 = vmor %vm1262, %vm1263
    %v1265 = vsel %vm1264, %v1257, %v1261
    %v1266 = vand.u32 2147483647, %v1241
    %vm1267 = vcmp.eq.f32.partialorder %v1266, 8.507059e+37
    %v1268 = vand.u32 %v1241, 2147483648
    %v1269 = vor.u32 1.1754944e-38, %v1268
    %v1270 = vsel %vm1267, %v1269, %v1265
    %v1271 = vmul.f32 1.0, %v1270
    %v1272 = vtanh.pop %v1232
    %v1273 = vtanh.pop %v1233
    %v1274 = vmul.f32 %v1256, 0.0
    %v1275 = vmul.f32 %v1271, 0.0
    %1278 = vrot.lane.b32.xlu0 %v1272, 96
    %v1279 = vpop.permute.xlu0 %1278
    %1280 = vrot.lane.b32.xlu0 %v1273, 96
    %v1281 = vpop.permute.xlu0 %1280
    %v1284 = vmul.f32 %v1256, %v1279
    %v1285 = vmul.f32 %v1271, %v1281
    %1288 = vrot.lane.b32.xlu0 %v1284, 16
    %v1289 = vpop.permute.xlu0 %1288
    %1290 = vrot.lane.b32.xlu0 %v1285, 16
    %v1291 = vpop.permute.xlu0 %1290
    %v1294 = vadd.f32 %v1274, %v1289
    %v1295 = vadd.f32 %v1275, %v1291
    %v1296 = vtanh.pop %v1294
    %v1297 = vtanh.pop %v1295
    %1300 = vrot.lane.b32.xlu0 %v1296, 32
    %v1301 = vpop.permute.xlu0 %1300
    %1302 = vrot.lane.b32.xlu0 %v1297, 32
    %v1303 = vpop.permute.xlu0 %1302
    %v1306 = vmul.f32 %v1256, %v1301
    %v1307 = vmul.f32 %v1271, %v1303
    %1310 = vrot.lane.b32.xlu0 %v1306, 80
    %v1311 = vpop.permute.xlu0 %1310
    %1312 = vrot.lane.b32.xlu0 %v1307, 80
    %v1313 = vpop.permute.xlu0 %1312
    %v1314 = vsel %vm168, %v1311, 0
    %v1316 = vsel %vm168, %v1313, 0
    %1318 = vmatpush.msra.mxu0 0.0
    %1319 = vmatpush.msra.mxu0 0.0
    %1320 = vmatpush.msra.mxu0 0.0
    %1321 = vmatpush.msra.mxu0 0.0
    %1322 = vmatpush.msra.mxu0 0.0
    %1323 = vmatpush.msra.mxu0 0.0
    %1324 = vmatpush.msra.mxu0 0.0
    %1325 = vmatpush.msra.mxu0 0.0
    %1326 = vmatpush.msra.mxu0 0.0
    %1327 = vmatpush.msra.mxu0 0.0
    %1328 = vmatpush.msra.mxu0 0.0
    %1329 = vmatpush.msra.mxu0 0.0
    %1330 = vmatpush.msra.mxu0 0.0
    %1331 = vmatpush.msra.mxu0 0.0
    %1332 = vmatpush.msra.mxu0 %v1075
    %1333 = vmatpush.msra.mxu0 %v1074
    %1334 = vmatmul.f32.gmra.mxu0 %v1314
    %v1335 = vpop.f32.mrf.mxu0
    %v1336 = vadd.f32 0.0, %v1335
    %1337 = vmatmul.f32.gmra.mxu0 %v1316
    %v1338 = vpop.f32.mrf.mxu0
    %v1339 = vadd.f32 0.0, %v1338
    %1340 = vdwg.mxu0
    %v1341 = vadd.f32 %v1168, %v1336
    %v1342 = vadd.f32 %v1171, %v1339
    %v1343 = vxor.u32 %v1341, 2147483648
    %v1344 = vxor.u32 %v1342, 2147483648
    %v1345 = vmul.f32 %v1343, 1.442695
    %v1346 = vpow.pop %v1345
    %v1347 = vmul.f32 %v1344, 1.442695
    %v1348 = vpow.pop %v1347
    %v1349 = vadd.f32 %v1346, 1.0
    %v1350 = vadd.f32 %v1348, 1.0
    %v1351 = vrcp.pop %v1349
    %v1352 = vmul.f32 %v1349, %v1351
    %v1353 = vsub.f32 1.0, %v1352
    %v1354 = vmul.f32 %v1351, %v1353
    %v1355 = vadd.f32 %v1351, %v1354
    %vm1356 = vweird.f32 %v1349
    %vm1357 = vweird.f32 %v1351
    %vm1358 = vmor %vm1356, %vm1357
    %v1359 = vsel %vm1358, %v1351, %v1355
    %v1360 = vand.u32 2147483647, %v1349
    %vm1361 = vcmp.eq.f32.partialorder %v1360, 8.507059e+37
    %v1362 = vand.u32 %v1349, 2147483648
    %v1363 = vor.u32 1.1754944e-38, %v1362
    %v1364 = vsel %vm1361, %v1363, %v1359
    %v1365 = vmul.f32 1.0, %v1364
    %v1366 = vrcp.pop %v1350
    %v1367 = vmul.f32 %v1350, %v1366
    %v1368 = vsub.f32 1.0, %v1367
    %v1369 = vmul.f32 %v1366, %v1368
    %v1370 = vadd.f32 %v1366, %v1369
    %vm1371 = vweird.f32 %v1350
    %vm1372 = vweird.f32 %v1366
    %vm1373 = vmor %vm1371, %vm1372
    %v1374 = vsel %vm1373, %v1366, %v1370
    %v1375 = vand.u32 2147483647, %v1350
    %vm1376 = vcmp.eq.f32.partialorder %v1375, 8.507059e+37
    %v1377 = vand.u32 %v1350, 2147483648
    %v1378 = vor.u32 1.1754944e-38, %v1377
    %v1379 = vsel %vm1376, %v1378, %v1374
    %v1380 = vmul.f32 1.0, %v1379
    %v1381 = vtanh.pop %v1341
    %v1382 = vtanh.pop %v1342
    %v1383 = vmul.f32 %v1365, %v1294
    %v1384 = vmul.f32 %v1380, %v1295
    %1387 = vrot.lane.b32.xlu0 %v1381, 96
    %v1388 = vpop.permute.xlu0 %1387
    %1389 = vrot.lane.b32.xlu0 %v1382, 96
    %v1390 = vpop.permute.xlu0 %1389
    %v1393 = vmul.f32 %v1365, %v1388
    %v1394 = vmul.f32 %v1380, %v1390
    %1397 = vrot.lane.b32.xlu0 %v1393, 16
    %v1398 = vpop.permute.xlu0 %1397
    %1399 = vrot.lane.b32.xlu0 %v1394, 16
    %v1400 = vpop.permute.xlu0 %1399
    %v1403 = vadd.f32 %v1383, %v1398
    %v1404 = vadd.f32 %v1384, %v1400
    %v1405 = vtanh.pop %v1403
    %v1406 = vtanh.pop %v1404
    %1409 = vrot.lane.b32.xlu0 %v1405, 32
    %v1410 = vpop.permute.xlu0 %1409
    %1411 = vrot.lane.b32.xlu0 %v1406, 32
    %v1412 = vpop.permute.xlu0 %1411
    %v1415 = vmul.f32 %v1365, %v1410
    %v1416 = vmul.f32 %v1380, %v1412
    %1419 = vrot.lane.b32.xlu0 %v1415, 80
    %v1420 = vpop.permute.xlu0 %1419
    %1421 = vrot.lane.b32.xlu0 %v1416, 80
    %v1422 = vpop.permute.xlu0 %1421
    %v1423 = vsel %vm168, %v1420, 0
    %v1425 = vsel %vm168, %v1422, 0
    %1427 = vmatpush.msra.mxu0 0.0
    %1428 = vmatpush.msra.mxu0 0.0
    %1429 = vmatpush.msra.mxu0 0.0
    %1430 = vmatpush.msra.mxu0 0.0
    %1431 = vmatpush.msra.mxu0 0.0
    %1432 = vmatpush.msra.mxu0 0.0
    %1433 = vmatpush.msra.mxu0 0.0
    %1434 = vmatpush.msra.mxu0 0.0
    %1435 = vmatpush.msra.mxu0 0.0
    %1436 = vmatpush.msra.mxu0 0.0
    %1437 = vmatpush.msra.mxu0 0.0
    %1438 = vmatpush.msra.mxu0 0.0
    %1439 = vmatpush.msra.mxu0 0.0
    %1440 = vmatpush.msra.mxu0 0.0
    %1441 = vmatpush.msra.mxu0 %v1075
    %1442 = vmatpush.msra.mxu0 %v1074
    %1443 = vmatmul.f32.gmra.mxu0 %v1423
    %v1444 = vpop.f32.mrf.mxu0
    %v1445 = vadd.f32 0.0, %v1444
    %1446 = vmatmul.f32.gmra.mxu0 %v1425
    %v1447 = vpop.f32.mrf.mxu0
    %v1448 = vadd.f32 0.0, %v1447
    %1449 = vdwg.mxu0
    %v1450 = vadd.f32 %v1174, %v1445
    %v1451 = vadd.f32 %v1177, %v1448
    %v1452 = vxor.u32 %v1450, 2147483648
    %v1453 = vxor.u32 %v1451, 2147483648
    %v1454 = vmul.f32 %v1452, 1.442695
    %v1455 = vpow.pop %v1454
    %v1456 = vmul.f32 %v1453, 1.442695
    %v1457 = vpow.pop %v1456
    %v1458 = vadd.f32 %v1455, 1.0
    %v1459 = vadd.f32 %v1457, 1.0
    %v1460 = vrcp.pop %v1458
    %v1461 = vmul.f32 %v1458, %v1460
    %v1462 = vsub.f32 1.0, %v1461
    %v1463 = vmul.f32 %v1460, %v1462
    %v1464 = vadd.f32 %v1460, %v1463
    %vm1465 = vweird.f32 %v1458
    %vm1466 = vweird.f32 %v1460
    %vm1467 = vmor %vm1465, %vm1466
    %v1468 = vsel %vm1467, %v1460, %v1464
    %v1469 = vand.u32 2147483647, %v1458
    %vm1470 = vcmp.eq.f32.partialorder %v1469, 8.507059e+37
    %v1471 = vand.u32 %v1458, 2147483648
    %v1472 = vor.u32 1.1754944e-38, %v1471
    %v1473 = vsel %vm1470, %v1472, %v1468
    %v1474 = vmul.f32 1.0, %v1473
    %v1475 = vrcp.pop %v1459
    %v1476 = vmul.f32 %v1459, %v1475
    %v1477 = vsub.f32 1.0, %v1476
    %v1478 = vmul.f32 %v1475, %v1477
    %v1479 = vadd.f32 %v1475, %v1478
    %vm1480 = vweird.f32 %v1459
    %vm1481 = vweird.f32 %v1475
    %vm1482 = vmor %vm1480, %vm1481
    %v1483 = vsel %vm1482, %v1475, %v1479
    %v1484 = vand.u32 2147483647, %v1459
    %vm1485 = vcmp.eq.f32.partialorder %v1484, 8.507059e+37
    %v1486 = vand.u32 %v1459, 2147483648
    %v1487 = vor.u32 1.1754944e-38, %v1486
    %v1488 = vsel %vm1485, %v1487, %v1483
    %v1489 = vmul.f32 1.0, %v1488
    %v1490 = vtanh.pop %v1450
    %v1491 = vtanh.pop %v1451
    %v1492 = vmul.f32 %v1474, %v1403
    %v1493 = vmul.f32 %v1489, %v1404
    %1496 = vrot.lane.b32.xlu0 %v1490, 96
    %v1497 = vpop.permute.xlu0 %1496
    %1498 = vrot.lane.b32.xlu0 %v1491, 96
    %v1499 = vpop.permute.xlu0 %1498
    %v1502 = vmul.f32 %v1474, %v1497
    %v1503 = vmul.f32 %v1489, %v1499
    %1506 = vrot.lane.b32.xlu0 %v1502, 16
    %v1507 = vpop.permute.xlu0 %1506
    %1508 = vrot.lane.b32.xlu0 %v1503, 16
    %v1509 = vpop.permute.xlu0 %1508
    %v1512 = vadd.f32 %v1492, %v1507
    %v1513 = vadd.f32 %v1493, %v1509
    %v1514 = vtanh.pop %v1512
    %v1515 = vtanh.pop %v1513
    %1518 = vrot.lane.b32.xlu0 %v1514, 32
    %v1519 = vpop.permute.xlu0 %1518
    %1520 = vrot.lane.b32.xlu0 %v1515, 32
    %v1521 = vpop.permute.xlu0 %1520
    %v1524 = vmul.f32 %v1474, %v1519
    %v1525 = vmul.f32 %v1489, %v1521
    %1528 = vrot.lane.b32.xlu0 %v1524, 80
    %v1529 = vpop.permute.xlu0 %1528
    %1530 = vrot.lane.b32.xlu0 %v1525, 80
    %v1531 = vpop.permute.xlu0 %1530
    %v1532 = vsel %vm168, %v1529, 0
    %v1534 = vsel %vm168, %v1531, 0
    %1536 = vmatpush.msra.mxu0 0.0
    %1537 = vmatpush.msra.mxu0 0.0
    %1538 = vmatpush.msra.mxu0 0.0
    %1539 = vmatpush.msra.mxu0 0.0
    %1540 = vmatpush.msra.mxu0 0.0
    %1541 = vmatpush.msra.mxu0 0.0
    %1542 = vmatpush.msra.mxu0 0.0
    %1543 = vmatpush.msra.mxu0 0.0
    %1544 = vmatpush.msra.mxu0 0.0
    %1545 = vmatpush.msra.mxu0 0.0
    %1546 = vmatpush.msra.mxu0 0.0
    %1547 = vmatpush.msra.mxu0 0.0
    %1548 = vmatpush.msra.mxu0 0.0
    %1549 = vmatpush.msra.mxu0 0.0
    %1550 = vmatpush.msra.mxu0 %v1075
    %1551 = vmatpush.msra.mxu0 %v1074
    %1552 = vmatmul.f32.gmra.mxu0 %v1532
    %v1553 = vpop.f32.mrf.mxu0
    %v1554 = vadd.f32 0.0, %v1553
    %1555 = vmatmul.f32.gmra.mxu0 %v1534
    %v1556 = vpop.f32.mrf.mxu0
    %v1557 = vadd.f32 0.0, %v1556
    %1558 = vdwg.mxu0
    %v1559 = vadd.f32 %v1180, %v1554
    %v1560 = vadd.f32 %v1183, %v1557
    %v1561 = vxor.u32 %v1559, 2147483648
    %v1562 = vxor.u32 %v1560, 2147483648
    %v1563 = vmul.f32 %v1561, 1.442695
    %v1564 = vpow.pop %v1563
    %v1565 = vmul.f32 %v1562, 1.442695
    %v1566 = vpow.pop %v1565
    %v1567 = vadd.f32 %v1564, 1.0
    %v1568 = vadd.f32 %v1566, 1.0
    %v1569 = vrcp.pop %v1567
    %v1570 = vmul.f32 %v1567, %v1569
    %v1571 = vsub.f32 1.0, %v1570
    %v1572 = vmul.f32 %v1569, %v1571
    %v1573 = vadd.f32 %v1569, %v1572
    %vm1574 = vweird.f32 %v1567
    %vm1575 = vweird.f32 %v1569
    %vm1576 = vmor %vm1574, %vm1575
    %v1577 = vsel %vm1576, %v1569, %v1573
    %v1578 = vand.u32 2147483647, %v1567
    %vm1579 = vcmp.eq.f32.partialorder %v1578, 8.507059e+37
    %v1580 = vand.u32 %v1567, 2147483648
    %v1581 = vor.u32 1.1754944e-38, %v1580
    %v1582 = vsel %vm1579, %v1581, %v1577
    %v1583 = vmul.f32 1.0, %v1582
    %v1584 = vrcp.pop %v1568
    %v1585 = vmul.f32 %v1568, %v1584
    %v1586 = vsub.f32 1.0, %v1585
    %v1587 = vmul.f32 %v1584, %v1586
    %v1588 = vadd.f32 %v1584, %v1587
    %vm1589 = vweird.f32 %v1568
    %vm1590 = vweird.f32 %v1584
    %vm1591 = vmor %vm1589, %vm1590
    %v1592 = vsel %vm1591, %v1584, %v1588
    %v1593 = vand.u32 2147483647, %v1568
    %vm1594 = vcmp.eq.f32.partialorder %v1593, 8.507059e+37
    %v1595 = vand.u32 %v1568, 2147483648
    %v1596 = vor.u32 1.1754944e-38, %v1595
    %v1597 = vsel %vm1594, %v1596, %v1592
    %v1598 = vmul.f32 1.0, %v1597
    %v1599 = vtanh.pop %v1559
    %v1600 = vtanh.pop %v1560
    %v1601 = vmul.f32 %v1583, %v1512
    %v1602 = vmul.f32 %v1598, %v1513
    %1605 = vrot.lane.b32.xlu0 %v1599, 96
    %v1606 = vpop.permute.xlu0 %1605
    %1607 = vrot.lane.b32.xlu0 %v1600, 96
    %v1608 = vpop.permute.xlu0 %1607
    %v1611 = vmul.f32 %v1583, %v1606
    %v1612 = vmul.f32 %v1598, %v1608
    %1615 = vrot.lane.b32.xlu0 %v1611, 16
    %v1616 = vpop.permute.xlu0 %1615
    %1617 = vrot.lane.b32.xlu0 %v1612, 16
    %v1618 = vpop.permute.xlu0 %1617
    %v1621 = vadd.f32 %v1601, %v1616
    %v1622 = vadd.f32 %v1602, %v1618
    %v1623 = vtanh.pop %v1621
    %v1624 = vtanh.pop %v1622
    %1627 = vrot.lane.b32.xlu0 %v1623, 32
    %v1628 = vpop.permute.xlu0 %1627
    %1629 = vrot.lane.b32.xlu0 %v1624, 32
    %v1630 = vpop.permute.xlu0 %1629
    %v1633 = vmul.f32 %v1583, %v1628
    %v1634 = vmul.f32 %v1598, %v1630
    %1637 = vrot.lane.b32.xlu0 %v1633, 80
    %v1638 = vpop.permute.xlu0 %1637
    %1639 = vrot.lane.b32.xlu0 %v1634, 80
    %v1640 = vpop.permute.xlu0 %1639
    %v1641 = vsel %vm168, %v1638, 0
    %v1643 = vsel %vm168, %v1640, 0
    %1645 = vmatpush.msra.mxu0 0.0
    %1646 = vmatpush.msra.mxu0 0.0
    %1647 = vmatpush.msra.mxu0 0.0
    %1648 = vmatpush.msra.mxu0 0.0
    %1649 = vmatpush.msra.mxu0 0.0
    %1650 = vmatpush.msra.mxu0 0.0
    %1651 = vmatpush.msra.mxu0 0.0
    %1652 = vmatpush.msra.mxu0 0.0
    %1653 = vmatpush.msra.mxu0 0.0
    %1654 = vmatpush.msra.mxu0 0.0
    %1655 = vmatpush.msra.mxu0 0.0
    %1656 = vmatpush.msra.mxu0 0.0
    %1657 = vmatpush.msra.mxu0 0.0
    %1658 = vmatpush.msra.mxu0 0.0
    %1659 = vmatpush.msra.mxu0 %v1075
    %1660 = vmatpush.msra.mxu0 %v1074
    %1661 = vmatmul.f32.gmra.mxu0 %v1641
    %v1662 = vpop.f32.mrf.mxu0
    %v1663 = vadd.f32 0.0, %v1662
    %1664 = vmatmul.f32.gmra.mxu0 %v1643
    %v1665 = vpop.f32.mrf.mxu0
    %v1666 = vadd.f32 0.0, %v1665
    %1667 = vdwg.mxu0
    %v1668 = vadd.f32 %v1186, %v1663
    %v1669 = vadd.f32 %v1189, %v1666
    %v1670 = vxor.u32 %v1668, 2147483648
    %v1671 = vxor.u32 %v1669, 2147483648
    %v1672 = vmul.f32 %v1670, 1.442695
    %v1673 = vpow.pop %v1672
    %v1674 = vmul.f32 %v1671, 1.442695
    %v1675 = vpow.pop %v1674
    %v1676 = vadd.f32 %v1673, 1.0
    %v1677 = vadd.f32 %v1675, 1.0
    %v1678 = vrcp.pop %v1676
    %v1679 = vmul.f32 %v1676, %v1678
    %v1680 = vsub.f32 1.0, %v1679
    %v1681 = vmul.f32 %v1678, %v1680
    %v1682 = vadd.f32 %v1678, %v1681
    %vm1683 = vweird.f32 %v1676
    %vm1684 = vweird.f32 %v1678
    %vm1685 = vmor %vm1683, %vm1684
    %v1686 = vsel %vm1685, %v1678, %v1682
    %v1687 = vand.u32 2147483647, %v1676
    %vm1688 = vcmp.eq.f32.partialorder %v1687, 8.507059e+37
    %v1689 = vand.u32 %v1676, 2147483648
    %v1690 = vor.u32 1.1754944e-38, %v1689
    %v1691 = vsel %vm1688, %v1690, %v1686
    %v1692 = vmul.f32 1.0, %v1691
    %v1693 = vrcp.pop %v1677
    %v1694 = vmul.f32 %v1677, %v1693
    %v1695 = vsub.f32 1.0, %v1694
    %v1696 = vmul.f32 %v1693, %v1695
    %v1697 = vadd.f32 %v1693, %v1696
    %vm1698 = vweird.f32 %v1677
    %vm1699 = vweird.f32 %v1693
    %vm1700 = vmor %vm1698, %vm1699
    %v1701 = vsel %vm1700, %v1693, %v1697
    %v1702 = vand.u32 2147483647, %v1677
    %vm1703 = vcmp.eq.f32.partialorder %v1702, 8.507059e+37
    %v1704 = vand.u32 %v1677, 2147483648
    %v1705 = vor.u32 1.1754944e-38, %v1704
    %v1706 = vsel %vm1703, %v1705, %v1701
    %v1707 = vmul.f32 1.0, %v1706
    %v1708 = vtanh.pop %v1668
    %v1709 = vtanh.pop %v1669
    %v1710 = vmul.f32 %v1692, %v1621
    %v1711 = vmul.f32 %v1707, %v1622
    %1714 = vrot.lane.b32.xlu0 %v1708, 96
    %v1715 = vpop.permute.xlu0 %1714
    %1716 = vrot.lane.b32.xlu0 %v1709, 96
    %v1717 = vpop.permute.xlu0 %1716
    %v1720 = vmul.f32 %v1692, %v1715
    %v1721 = vmul.f32 %v1707, %v1717
    %1724 = vrot.lane.b32.xlu0 %v1720, 16
    %v1725 = vpop.permute.xlu0 %1724
    %1726 = vrot.lane.b32.xlu0 %v1721, 16
    %v1727 = vpop.permute.xlu0 %1726
    %v1730 = vadd.f32 %v1710, %v1725
    %v1731 = vadd.f32 %v1711, %v1727
    %v1732 = vtanh.pop %v1730
    %v1733 = vtanh.pop %v1731
    %1736 = vrot.lane.b32.xlu0 %v1732, 32
    %v1737 = vpop.permute.xlu0 %1736
    %1738 = vrot.lane.b32.xlu0 %v1733, 32
    %v1739 = vpop.permute.xlu0 %1738
    %v1742 = vmul.f32 %v1692, %v1737
    %v1743 = vmul.f32 %v1707, %v1739
    %1746 = vrot.lane.b32.xlu0 %v1742, 80
    %v1747 = vpop.permute.xlu0 %1746
    %1748 = vrot.lane.b32.xlu0 %v1743, 80
    %v1749 = vpop.permute.xlu0 %1748
    %v1750 = vsel %vm168, %v1747, 0
    %v1752 = vsel %vm168, %v1749, 0
    %1754 = vmatpush.msra.mxu0 0.0
    %1755 = vmatpush.msra.mxu0 0.0
    %1756 = vmatpush.msra.mxu0 0.0
    %1757 = vmatpush.msra.mxu0 0.0
    %1758 = vmatpush.msra.mxu0 0.0
    %1759 = vmatpush.msra.mxu0 0.0
    %1760 = vmatpush.msra.mxu0 0.0
    %1761 = vmatpush.msra.mxu0 0.0
    %1762 = vmatpush.msra.mxu0 0.0
    %1763 = vmatpush.msra.mxu0 0.0
    %1764 = vmatpush.msra.mxu0 0.0
    %1765 = vmatpush.msra.mxu0 0.0
    %1766 = vmatpush.msra.mxu0 0.0
    %1767 = vmatpush.msra.mxu0 0.0
    %1768 = vmatpush.msra.mxu0 %v1075
    %1769 = vmatpush.msra.mxu0 %v1074
    %1770 = vmatmul.f32.gmra.mxu0 %v1750
    %v1771 = vpop.f32.mrf.mxu0
    %v1772 = vadd.f32 0.0, %v1771
    %1773 = vmatmul.f32.gmra.mxu0 %v1752
    %v1774 = vpop.f32.mrf.mxu0
    %v1775 = vadd.f32 0.0, %v1774
    %1776 = vdwg.mxu0
    %v1777 = vadd.f32 %v1192, %v1772
    %v1778 = vadd.f32 %v1195, %v1775
    %v1779 = vxor.u32 %v1777, 2147483648
    %v1780 = vxor.u32 %v1778, 2147483648
    %v1781 = vmul.f32 %v1779, 1.442695
    %v1782 = vpow.pop %v1781
    %v1783 = vmul.f32 %v1780, 1.442695
    %v1784 = vpow.pop %v1783
    %v1785 = vadd.f32 %v1782, 1.0
    %v1786 = vadd.f32 %v1784, 1.0
    %v1787 = vrcp.pop %v1785
    %v1788 = vmul.f32 %v1785, %v1787
    %v1789 = vsub.f32 1.0, %v1788
    %v1790 = vmul.f32 %v1787, %v1789
    %v1791 = vadd.f32 %v1787, %v1790
    %vm1792 = vweird.f32 %v1785
    %vm1793 = vweird.f32 %v1787
    %vm1794 = vmor %vm1792, %vm1793
    %v1795 = vsel %vm1794, %v1787, %v1791
    %v1796 = vand.u32 2147483647, %v1785
    %vm1797 = vcmp.eq.f32.partialorder %v1796, 8.507059e+37
    %v1798 = vand.u32 %v1785, 2147483648
    %v1799 = vor.u32 1.1754944e-38, %v1798
    %v1800 = vsel %vm1797, %v1799, %v1795
    %v1801 = vmul.f32 1.0, %v1800
    %v1802 = vrcp.pop %v1786
    %v1803 = vmul.f32 %v1786, %v1802
    %v1804 = vsub.f32 1.0, %v1803
    %v1805 = vmul.f32 %v1802, %v1804
    %v1806 = vadd.f32 %v1802, %v1805
    %vm1807 = vweird.f32 %v1786
    %vm1808 = vweird.f32 %v1802
    %vm1809 = vmor %vm1807, %vm1808
    %v1810 = vsel %vm1809, %v1802, %v1806
    %v1811 = vand.u32 2147483647, %v1786
    %vm1812 = vcmp.eq.f32.partialorder %v1811, 8.507059e+37
    %v1813 = vand.u32 %v1786, 2147483648
    %v1814 = vor.u32 1.1754944e-38, %v1813
    %v1815 = vsel %vm1812, %v1814, %v1810
    %v1816 = vmul.f32 1.0, %v1815
    %v1817 = vtanh.pop %v1777
    %v1818 = vtanh.pop %v1778
    %v1819 = vmul.f32 %v1801, %v1730
    %v1820 = vmul.f32 %v1816, %v1731
    %1823 = vrot.lane.b32.xlu0 %v1817, 96
    %v1824 = vpop.permute.xlu0 %1823
    %1825 = vrot.lane.b32.xlu0 %v1818, 96
    %v1826 = vpop.permute.xlu0 %1825
    %v1829 = vmul.f32 %v1801, %v1824
    %v1830 = vmul.f32 %v1816, %v1826
    %1833 = vrot.lane.b32.xlu0 %v1829, 16
    %v1834 = vpop.permute.xlu0 %1833
    %1835 = vrot.lane.b32.xlu0 %v1830, 16
    %v1836 = vpop.permute.xlu0 %1835
    %v1839 = vadd.f32 %v1819, %v1834
    %v1840 = vadd.f32 %v1820, %v1836
    %v1841 = vtanh.pop %v1839
    %v1842 = vtanh.pop %v1840
    %1845 = vrot.lane.b32.xlu0 %v1841, 32
    %v1846 = vpop.permute.xlu0 %1845
    %1847 = vrot.lane.b32.xlu0 %v1842, 32
    %v1848 = vpop.permute.xlu0 %1847
    %v1851 = vmul.f32 %v1801, %v1846
    %v1852 = vmul.f32 %v1816, %v1848
    %1855 = vrot.lane.b32.xlu0 %v1851, 80
    %v1856 = vpop.permute.xlu0 %1855
    %1857 = vrot.lane.b32.xlu0 %v1852, 80
    %v1858 = vpop.permute.xlu0 %1857
    %v1859 = vsel %vm168, %v1856, 0
    %v1861 = vsel %vm168, %v1858, 0
    %1863 = vmatpush.msra.mxu0 0.0
    %1864 = vmatpush.msra.mxu0 0.0
    %1865 = vmatpush.msra.mxu0 0.0
    %1866 = vmatpush.msra.mxu0 0.0
    %1867 = vmatpush.msra.mxu0 0.0
    %1868 = vmatpush.msra.mxu0 0.0
    %1869 = vmatpush.msra.mxu0 0.0
    %1870 = vmatpush.msra.mxu0 0.0
    %1871 = vmatpush.msra.mxu0 0.0
    %1872 = vmatpush.msra.mxu0 0.0
    %1873 = vmatpush.msra.mxu0 0.0
    %1874 = vmatpush.msra.mxu0 0.0
    %1875 = vmatpush.msra.mxu0 0.0
    %1876 = vmatpush.msra.mxu0 0.0
    %1877 = vmatpush.msra.mxu0 %v1075
    %1878 = vmatpush.msra.mxu0 %v1074
    %1879 = vmatmul.f32.gmra.mxu0 %v1859
    %v1880 = vpop.f32.mrf.mxu0
    %v1881 = vadd.f32 0.0, %v1880
    %1882 = vmatmul.f32.gmra.mxu0 %v1861
    %v1883 = vpop.f32.mrf.mxu0
    %v1884 = vadd.f32 0.0, %v1883
    %1885 = vdwg.mxu0
    %v1886 = vadd.f32 %v1198, %v1881
    %v1887 = vadd.f32 %v1201, %v1884
    %v1888 = vxor.u32 %v1886, 2147483648
    %v1889 = vxor.u32 %v1887, 2147483648
    %v1890 = vmul.f32 %v1888, 1.442695
    %v1891 = vpow.pop %v1890
    %v1892 = vmul.f32 %v1889, 1.442695
    %v1893 = vpow.pop %v1892
    %v1894 = vadd.f32 %v1891, 1.0
    %v1895 = vadd.f32 %v1893, 1.0
    %v1896 = vrcp.pop %v1894
    %v1897 = vmul.f32 %v1894, %v1896
    %v1898 = vsub.f32 1.0, %v1897
    %v1899 = vmul.f32 %v1896, %v1898
    %v1900 = vadd.f32 %v1896, %v1899
    %vm1901 = vweird.f32 %v1894
    %vm1902 = vweird.f32 %v1896
    %vm1903 = vmor %vm1901, %vm1902
    %v1904 = vsel %vm1903, %v1896, %v1900
    %v1905 = vand.u32 2147483647, %v1894
    %vm1906 = vcmp.eq.f32.partialorder %v1905, 8.507059e+37
    %v1907 = vand.u32 %v1894, 2147483648
    %v1908 = vor.u32 1.1754944e-38, %v1907
    %v1909 = vsel %vm1906, %v1908, %v1904
    %v1910 = vmul.f32 1.0, %v1909
    %v1911 = vrcp.pop %v1895
    %v1912 = vmul.f32 %v1895, %v1911
    %v1913 = vsub.f32 1.0, %v1912
    %v1914 = vmul.f32 %v1911, %v1913
    %v1915 = vadd.f32 %v1911, %v1914
    %vm1916 = vweird.f32 %v1895
    %vm1917 = vweird.f32 %v1911
    %vm1918 = vmor %vm1916, %vm1917
    %v1919 = vsel %vm1918, %v1911, %v1915
    %v1920 = vand.u32 2147483647, %v1895
    %vm1921 = vcmp.eq.f32.partialorder %v1920, 8.507059e+37
    %v1922 = vand.u32 %v1895, 2147483648
    %v1923 = vor.u32 1.1754944e-38, %v1922
    %v1924 = vsel %vm1921, %v1923, %v1919
    %v1925 = vmul.f32 1.0, %v1924
    %v1926 = vtanh.pop %v1886
    %v1927 = vtanh.pop %v1887
    %v1928 = vmul.f32 %v1910, %v1839
    %v1929 = vmul.f32 %v1925, %v1840
    %1932 = vrot.lane.b32.xlu0 %v1926, 96
    %v1933 = vpop.permute.xlu0 %1932
    %1934 = vrot.lane.b32.xlu0 %v1927, 96
    %v1935 = vpop.permute.xlu0 %1934
    %v1938 = vmul.f32 %v1910, %v1933
    %v1939 = vmul.f32 %v1925, %v1935
    %1942 = vrot.lane.b32.xlu0 %v1938, 16
    %v1943 = vpop.permute.xlu0 %1942
    %1944 = vrot.lane.b32.xlu0 %v1939, 16
    %v1945 = vpop.permute.xlu0 %1944
    %v1948 = vadd.f32 %v1928, %v1943
    %v1949 = vadd.f32 %v1929, %v1945
    %v1950 = vtanh.pop %v1948
    %v1951 = vtanh.pop %v1949
    %1954 = vrot.lane.b32.xlu0 %v1950, 32
    %v1955 = vpop.permute.xlu0 %1954
    %1956 = vrot.lane.b32.xlu0 %v1951, 32
    %v1957 = vpop.permute.xlu0 %1956
    %v1960 = vmul.f32 %v1910, %v1955
    %v1961 = vmul.f32 %v1925, %v1957
    %1964 = vrot.lane.b32.xlu0 %v1960, 80
    %v1965 = vpop.permute.xlu0 %1964
    %1966 = vrot.lane.b32.xlu0 %v1961, 80
    %v1967 = vpop.permute.xlu0 %1966
    %v1968 = vsel %vm168, %v1965, 0
    %v1970 = vsel %vm168, %v1967, 0
    %1972 = vmatpush.msra.mxu0 0.0
    %1973 = vmatpush.msra.mxu0 0.0
    %1974 = vmatpush.msra.mxu0 0.0
    %1975 = vmatpush.msra.mxu0 0.0
    %1976 = vmatpush.msra.mxu0 0.0
    %1977 = vmatpush.msra.mxu0 0.0
    %1978 = vmatpush.msra.mxu0 0.0
    %1979 = vmatpush.msra.mxu0 0.0
    %1980 = vmatpush.msra.mxu0 0.0
    %1981 = vmatpush.msra.mxu0 0.0
    %1982 = vmatpush.msra.mxu0 0.0
    %1983 = vmatpush.msra.mxu0 0.0
    %1984 = vmatpush.msra.mxu0 0.0
    %1985 = vmatpush.msra.mxu0 0.0
    %1986 = vmatpush.msra.mxu0 %v1075
    %1987 = vmatpush.msra.mxu0 %v1074
    %1988 = vmatmul.f32.gmra.mxu0 %v1968
    %v1989 = vpop.f32.mrf.mxu0
    %v1990 = vadd.f32 0.0, %v1989
    %1991 = vmatmul.f32.gmra.mxu0 %v1970
    %v1992 = vpop.f32.mrf.mxu0
    %v1993 = vadd.f32 0.0, %v1992
    %1994 = vdwg.mxu0
    %v1995 = vadd.f32 %v1204, %v1990
    %v1996 = vadd.f32 %v1207, %v1993
    %v1997 = vxor.u32 %v1995, 2147483648
    %v1998 = vxor.u32 %v1996, 2147483648
    %v1999 = vmul.f32 %v1997, 1.442695
    %v2000 = vpow.pop %v1999
    %v2001 = vmul.f32 %v1998, 1.442695
    %v2002 = vpow.pop %v2001
    %v2003 = vadd.f32 %v2000, 1.0
    %v2004 = vadd.f32 %v2002, 1.0
    %v2005 = vrcp.pop %v2003
    %v2006 = vmul.f32 %v2003, %v2005
    %v2007 = vsub.f32 1.0, %v2006
    %v2008 = vmul.f32 %v2005, %v2007
    %v2009 = vadd.f32 %v2005, %v2008
    %vm2010 = vweird.f32 %v2003
    %vm2011 = vweird.f32 %v2005
    %vm2012 = vmor %vm2010, %vm2011
    %v2013 = vsel %vm2012, %v2005, %v2009
    %v2014 = vand.u32 2147483647, %v2003
    %vm2015 = vcmp.eq.f32.partialorder %v2014, 8.507059e+37
    %v2016 = vand.u32 %v2003, 2147483648
    %v2017 = vor.u32 1.1754944e-38, %v2016
    %v2018 = vsel %vm2015, %v2017, %v2013
    %v2019 = vmul.f32 1.0, %v2018
    %v2020 = vrcp.pop %v2004
    %v2021 = vmul.f32 %v2004, %v2020
    %v2022 = vsub.f32 1.0, %v2021
    %v2023 = vmul.f32 %v2020, %v2022
    %v2024 = vadd.f32 %v2020, %v2023
    %vm2025 = vweird.f32 %v2004
    %vm2026 = vweird.f32 %v2020
    %vm2027 = vmor %vm2025, %vm2026
    %v2028 = vsel %vm2027, %v2020, %v2024
    %v2029 = vand.u32 2147483647, %v2004
    %vm2030 = vcmp.eq.f32.partialorder %v2029, 8.507059e+37
    %v2031 = vand.u32 %v2004, 2147483648
    %v2032 = vor.u32 1.1754944e-38, %v2031
    %v2033 = vsel %vm2030, %v2032, %v2028
    %v2034 = vmul.f32 1.0, %v2033
    %v2035 = vtanh.pop %v1995
    %v2036 = vtanh.pop %v1996
    %v2037 = vmul.f32 %v2019, %v1948
    %v2038 = vmul.f32 %v2034, %v1949
    %2041 = vrot.lane.b32.xlu0 %v2035, 96
    %v2042 = vpop.permute.xlu0 %2041
    %2043 = vrot.lane.b32.xlu0 %v2036, 96
    %v2044 = vpop.permute.xlu0 %2043
    %v2047 = vmul.f32 %v2019, %v2042
    %v2048 = vmul.f32 %v2034, %v2044
    %2051 = vrot.lane.b32.xlu0 %v2047, 16
    %v2052 = vpop.permute.xlu0 %2051
    %2053 = vrot.lane.b32.xlu0 %v2048, 16
    %v2054 = vpop.permute.xlu0 %2053
    %v2057 = vadd.f32 %v2037, %v2052
    %v2058 = vadd.f32 %v2038, %v2054
    %v2059 = vtanh.pop %v2057
    %v2060 = vtanh.pop %v2058
    %2063 = vrot.lane.b32.xlu0 %v2059, 32
    %v2064 = vpop.permute.xlu0 %2063
    %2065 = vrot.lane.b32.xlu0 %v2060, 32
    %v2066 = vpop.permute.xlu0 %2065
    %v2069 = vmul.f32 %v2019, %v2064
    %v2070 = vmul.f32 %v2034, %v2066
    %2073 = vrot.lane.b32.xlu0 %v2069, 80
    %v2074 = vpop.permute.xlu0 %2073
    %2075 = vrot.lane.b32.xlu0 %v2070, 80
    %v2076 = vpop.permute.xlu0 %2075
    %2079 = vst.msk [vmem:[#allocation3] sm:$0xff] %vm168, %v2074
    %2080 = vst.msk [vmem:[#allocation3 + $0x8] sm:$0xff] %vm168, %v2076
    // Predicated region
    $region30: #{tpu_custom_call.1} parent=1 // pred_check
      _
    $region31: #{tpu_custom_call.1} parent=1 // pred_check_branch
      %2082 = sbr.rel (0) target = $region33
    $region32: #{tpu_custom_call.1} parent=1 // pred_region
      %2084 = vsyncadd [#allocation4], 0
      %s2085 = sshll.u32 [#allocation3], 4
      %s2086 = int_to_ptr.vmem [resolvable:$true] %s2085
      %s2087 = sshll.u32 %s7, 4
      %s2088 = int_to_ptr.hbm [resolvable:$true] %s2087
      %2093 = dma.vmem_to_hbm [thread:$0]  %s2086, 256, %s2088, [#allocation4], 128, 128, 8
    $region33: #{tpu_custom_call.1} parent=1 // pred_fallthru
      _
    // Predicated region
    $region34: #{tpu_custom_call.1} parent=1 // pred_check
      _
    $region35: #{tpu_custom_call.1} parent=1 // pred_check_branch
      %2095 = sbr.rel (0) target = $region37
    $region36: #{tpu_custom_call.1} parent=1 // pred_region
      %2097 = dma.done [#allocation4], 256
    $region37: #{tpu_custom_call.1} parent=1 // pred_fallthru
      _
    %2098 = vsyncpa [#allocation4], 1

</llo_original>
